<compile_context>
chip_gen: v7x
topology: tpu7x:2x2x1
jax: 0.10.0
libtpu: 0.0.40
codegen_flags: <defaults>
</compile_context>

<pallas_src>
import functools

import jax
import jax.numpy as jnp
from jax import lax
from jax.experimental import pallas as pl
from jax.experimental.pallas import tpu as pltpu

BN_EPS = 1e-5
LANE = 128
SUBLANE = 8


def _round_up(x, m):
    return (x + m - 1) // m * m


# --------------------------------------------------------------------------- #
# Pass 1: halo-blocked grouped conv (both branches) + partial BN statistics.   #
# --------------------------------------------------------------------------- #
def _conv_stats_kernel(x_hbm, wb_ref, wlr_ref, yl_ref, ys_ref, st_ref,
                       xbuf, dma_sem, *,
                       L_blk, L_out, K, Ks, off_small, stride, win_rows,
                       Cp_in, Cp_out, row_chunk, need_mask, out_dtype):
    n = pl.program_id(0)
    j = pl.program_id(1)
    base = pl.multiple_of(j * (L_blk * stride), SUBLANE)

    # Manually DMA the halo'd input window for this L-block: O(L_blk) VMEM per
    # grid step instead of the whole padded sample.
    cp = pltpu.make_async_copy(x_hbm.at[n, pl.ds(base, win_rows), :],
                               xbuf, dma_sem)
    cp.start()
    cp.wait()

    large_only = [t for t in range(K) if not (off_small <= t < off_small + Ks)]

    sum_l = jnp.zeros((1, Cp_out), jnp.float32)
    sq_l = jnp.zeros((1, Cp_out), jnp.float32)
    sum_s = jnp.zeros((1, Cp_out), jnp.float32)
    sq_s = jnp.zeros((1, Cp_out), jnp.float32)

    # Row sub-chunks keep the f32 accumulators register-resident: no im2col
    # slab materialization and no VMEM read-modify-write accumulator.
    for r0 in range(0, L_blk, row_chunk):
        rows = min(row_chunk, L_blk - r0)

        def xwin(t, _r0=r0, _rows=rows):
            start = _r0 * stride + t
            if stride == 1:
                return xbuf[pl.ds(start, _rows), :]
            # TODO(synk): strided sublane reads may lower to per-row copies;
            # restructure per-tap loads if a stride>1 config ever becomes hot.
            return xbuf[pl.ds(start, _rows, stride), :]

        # Taps where BOTH branches fire: one dot per tap against the fused
        # (Cp_in, 2*Cp_out) weight -> fills the 256-wide v6e/v7x MXU.
        acc2 = jnp.dot(xwin(off_small), wb_ref[pl.ds(0, Cp_in), :],
                       preferred_element_type=jnp.float32)
        for i in range(1, Ks):
            acc2 = acc2 + jnp.dot(xwin(off_small + i),
                                  wb_ref[pl.ds(i * Cp_in, Cp_in), :],
                                  preferred_element_type=jnp.float32)

        if need_mask:  # padded tail rows must not pollute the BN statistics
            row_ids = (lax.broadcasted_iota(jnp.int32, (rows, 1), 0)
                       + (j * L_blk + r0))
            m = (row_ids < L_out).astype(jnp.float32)
        else:
            m = None

        # Small branch first: store + stats, then its registers are dead
        # before the large-only taps run (halves peak live vregs).
        ys_c = acc2[:, Cp_out:]
        acc_l = acc2[:, :Cp_out]
        ys_ref[pl.ds(r0, rows), :] = ys_c.astype(out_dtype)
        ys_m = ys_c if m is None else ys_c * m
        sum_s = sum_s + jnp.sum(ys_m, axis=0, keepdims=True)
        sq_s = sq_s + jnp.sum(ys_m * ys_m, axis=0, keepdims=True)

        # Large-only taps: narrow (Cp_in, Cp_out) dots -> the small branch's
        # zero taps are never multiplied (~1/3 fewer MACs).
        for idx, t in enumerate(large_only):
            acc_l = acc_l + jnp.dot(xwin(t),
                                    wlr_ref[pl.ds(idx * Cp_in, Cp_in), :],
                                    preferred_element_type=jnp.float32)
        yl_ref[pl.ds(r0, rows), :] = acc_l.astype(out_dtype)
        yl_m = acc_l if m is None else acc_l * m
        sum_l = sum_l + jnp.sum(yl_m, axis=0, keepdims=True)
        sq_l = sq_l + jnp.sum(yl_m * yl_m, axis=0, keepdims=True)

    st_ref[...] = jnp.concatenate(
        [sum_l, sq_l, sum_s, sq_s, jnp.zeros((4, Cp_out), jnp.float32)],
        axis=0)


# --------------------------------------------------------------------------- #
# Pass 2: BN affine of both branches + branch sum (+ fused NCL transpose).     #
# --------------------------------------------------------------------------- #
def _bn_sum_kernel(yl_ref, ys_ref, coef_ref, out_ref, *, transpose_out):
    c = coef_ref[...]
    y = (yl_ref[...].astype(jnp.float32) * c[0:1, :]
         + ys_ref[...].astype(jnp.float32) * c[1:2, :] + c[2:3, :])
    if transpose_out:
        out_ref[...] = y.T          # write NCL directly (XLU slot is free here)
    else:
        out_ref[...] = y


def reparam_large_kernel_conv(x, params, *, small_kernel, large_kernel, stride,
                              groups, compute_dtype=jnp.bfloat16, l_block=512,
                              training=True):
    """ReparamLargeKernelConv forward. x: (N, C_in, L) f32, PyTorch NCL layout."""
    if not training:
        # TODO(synk): eval-mode BN (running statistics) needs the conv bias and
        # a stats-free path; only training-mode BN is implemented here.
        raise NotImplementedError("only training-mode BatchNorm is supported")
    assert small_kernel < large_kernel

    N, C_in, L = x.shape
    wl, ws = params['large_w'], params['small_w']
    C_out = wl.shape[0]
    cin_g, cout_g = C_in // groups, C_out // groups

    K, Ks = large_kernel, small_kernel
    pad_l, pad_s = K // 2, Ks // 2
    L_out = (L + 2 * pad_l - K) // stride + 1
    assert L_out == (L + 2 * pad_s - Ks) // stride + 1, \
        "branch output lengths must match to be summed"
    off_small = pad_l - pad_s

    Cp_in = _round_up(C_in, LANE)
    Cp_out = _round_up(C_out, LANE)

    L_blk = min(_round_up(l_block, SUBLANE), _round_up(L_out, SUBLANE))
    nLB = -(-L_out // L_blk)
    L_out_pad = nLB * L_blk
    need_mask = (L_out_pad != L_out)

    win_rows = _round_up((L_blk - 1) * stride + K, SUBLANE)
    L_x = _round_up(max((nLB - 1) * L_blk * stride + win_rows, pad_l + L),
                    SUBLANE)
    # rows per register-resident accumulator chunk (acc <= ~16 vregs)
    row_chunk = max(SUBLANE, min(L_blk, (8192 // Cp_out) // SUBLANE * SUBLANE))

    # ---- host-side glue: NCL -> NLC, channel pad to a lane multiple, shared
    #      zero padding for the large branch (one fused XLA copy).
    # TODO(synk): folding this pad/transpose into the kernel's halo DMA would
    # save one extra HBM pass over x.
    x_pad = jnp.zeros((N, L_x, Cp_in), compute_dtype)
    x_pad = x_pad.at[:, pad_l:pad_l + L, :C_in].set(
        jnp.transpose(x, (0, 2, 1)).astype(compute_dtype))

    # ---- weights: groups fused block-diagonally into a dense (Cp_in, Cp_out)
    #      matrix; taps split into "both-branch" taps (fused (Cp_in, 2*Cp_out)
    #      weight) and "large-only" taps (narrow weight).  The conv bias is
    #      dropped: training-mode BN subtracts the batch mean, which cancels a
    #      per-channel constant exactly.
    def pack_taps(w, K_w):
        # torch (C_out, C_in/groups, K_w) -> (K_w, Cp_in, Cp_out) block-diag
        wg = jnp.transpose(
            w.astype(jnp.float32).reshape(groups, cout_g, cin_g, K_w),
            (3, 0, 2, 1))                                   # (K_w, g, cin_g, cout_g)
        Wk = jnp.zeros((K_w, Cp_in, Cp_out), jnp.float32)
        for g in range(groups):
            Wk = Wk.at[:, g * cin_g:(g + 1) * cin_g,
                       g * cout_g:(g + 1) * cout_g].set(wg[:, g])
        return Wk

    Wl_t = pack_taps(wl, K)                                 # (K, Cp_in, Cp_out)
    Ws_t = pack_taps(ws, Ks)                                # (Ks, Cp_in, Cp_out)
    w_both = jnp.concatenate(
        [Wl_t[off_small:off_small + Ks], Ws_t], axis=-1,
    ).reshape(Ks * Cp_in, 2 * Cp_out).astype(compute_dtype)
    w_lrest = jnp.concatenate(
        [Wl_t[:off_small], Wl_t[off_small + Ks:]], axis=0,
    ).reshape((K - Ks) * Cp_in, Cp_out).astype(compute_dtype)

    # ---- generation-aware VMEM budget ----------------------------------------
    csz = jnp.dtype(compute_dtype).itemsize
    try:
        vmem_cap = int(pltpu.get_tpu_info().vmem_capacity_bytes)
    except Exception:
        vmem_cap = 64 << 20                                 # conservative (v7x)
    vmem_cap = max(vmem_cap, 64 << 20)
    blk_bytes = (win_rows * Cp_in * csz                      # halo'd input window
                 + 2 * (int(w_both.size) + int(w_lrest.size)) * csz
                 + 2 * 2 * L_blk * Cp_out * csz              # double-buffered outs
                 + 4 * 8 * Cp_out * 4)                       # stats / coefs
    vmem_bytes = int(min(max(2 * blk_bytes, 32 << 20), vmem_cap * 3 // 4))
    cparams = pltpu.CompilerParams(
        dimension_semantics=("parallel", "parallel"),        # 2-TC sharding on v7x
        vmem_limit_bytes=vmem_bytes)

    # ---- pass 1: conv (both branches) + partial BN stats ----------------------
    kernel1 = functools.partial(
        _conv_stats_kernel, L_blk=L_blk, L_out=L_out, K=K, Ks=Ks,
        off_small=off_small, stride=stride, win_rows=win_rows, Cp_in=Cp_in,
        Cp_out=Cp_out, row_chunk=row_chunk, need_mask=need_mask,
        out_dtype=compute_dtype)

    yl_h, ys_h, stats = pl.pallas_call(
        kernel1,
        grid=(N, nLB),
        in_specs=[
            pl.BlockSpec(memory_space=pl.ANY),   # x stays in HBM; halo DMA'd
            # TODO(synk): these index maps are constant; single-buffering them
            # (pl.Buffered(1)) would save one weight copy of VMEM.
            pl.BlockSpec((Ks * Cp_in, 2 * Cp_out), lambda n, j: (0, 0)),
            pl.BlockSpec(((K - Ks) * Cp_in, Cp_out), lambda n, j: (0, 0)),
        ],
        out_specs=[
            pl.BlockSpec((None, L_blk, Cp_out), lambda n, j: (n, j, 0)),
            pl.BlockSpec((None, L_blk, Cp_out), lambda n, j: (n, j, 0)),
            pl.BlockSpec((None, None, 8, Cp_out), lambda n, j: (n, j, 0, 0)),
        ],
        out_shape=(
            jax.ShapeDtypeStruct((N, L_out_pad, Cp_out), compute_dtype),
            jax.ShapeDtypeStruct((N, L_out_pad, Cp_out), compute_dtype),
            jax.ShapeDtypeStruct((N, nLB, 8, Cp_out), jnp.float32),
        ),
        scratch_shapes=[pltpu.VMEM((win_rows, Cp_in), compute_dtype),
                        pltpu.SemaphoreType.DMA],
        compiler_params=cparams,
    )(x_pad, w_both, w_lrest)

    # ---- finish BN statistics (tiny per-channel vectors, plain JAX) -----------
    s = jnp.sum(stats, axis=(0, 1))                          # (8, Cp_out)
    cnt = float(N * L_out)
    mean_l, mean_s = s[0] / cnt, s[2] / cnt
    var_l = jnp.maximum(s[1] / cnt - mean_l * mean_l, 0.0)   # biased variance
    var_s = jnp.maximum(s[3] / cnt - mean_s * mean_s, 0.0)

    def padded(v):
        return jnp.zeros((Cp_out,), jnp.float32).at[:C_out].set(
            v.astype(jnp.float32))

    g_l, b_l = padded(params['large_gamma']), padded(params['large_beta'])
    g_s, b_s = padded(params['small_gamma']), padded(params['small_beta'])
    scale_l = g_l * lax.rsqrt(var_l + BN_EPS)
    scale_s = g_s * lax.rsqrt(var_s + BN_EPS)
    shift = (b_l - mean_l * scale_l) + (b_s - mean_s * scale_s)
    coefs = jnp.concatenate(
        [scale_l[None], scale_s[None], shift[None],
         jnp.zeros((5, Cp_out), jnp.float32)], axis=0)       # (8, Cp_out)

    # ---- pass 2: BN affine + branch sum (+ fused NCL transpose) ---------------
    transpose_out = (L_blk % LANE == 0)
    kernel2 = functools.partial(_bn_sum_kernel, transpose_out=transpose_out)
    if transpose_out:
        out_spec = pl.BlockSpec((None, Cp_out, L_blk), lambda n, j: (n, 0, j))
        out_shape2 = jax.ShapeDtypeStruct((N, Cp_out, L_out_pad), jnp.float32)
    else:
        out_spec = pl.BlockSpec((None, L_blk, Cp_out), lambda n, j: (n, j, 0))
        out_shape2 = jax.ShapeDtypeStruct((N, L_out_pad, Cp_out), jnp.float32)

    out_pad = pl.pallas_call(
        kernel2,
        grid=(N, nLB),
        in_specs=[
            pl.BlockSpec((None, L_blk, Cp_out), lambda n, j: (n, j, 0)),
            pl.BlockSpec((None, L_blk, Cp_out), lambda n, j: (n, j, 0)),
            pl.BlockSpec((8, Cp_out), lambda n, j: (0, 0)),
        ],
        out_specs=out_spec,
        out_shape=out_shape2,
        compiler_params=cparams,
    )(yl_h, ys_h, coefs)

    if transpose_out:
        return out_pad[:, :C_out, :L_out]                    # already NCL
    return jnp.transpose(out_pad[:, :L_out, :C_out], (0, 2, 1))


def _reference(x, params, *, small_kernel, large_kernel, stride, groups):
    """Pure-JAX reference mirroring the PyTorch forward (training BN, with bias)."""
    def conv(w, b, K):
        pad = K // 2
        y = lax.conv_general_dilated(
            x, w, (stride,), [(pad, pad)],
            dimension_numbers=('NCH', 'OIH', 'NCH'),
            feature_group_count=groups)
        return y + b[None, :, None]

    def bn(y, gamma, beta):
        mean = jnp.mean(y, axis=(0, 2), keepdims=True)
        var = jnp.mean((y - mean) ** 2, axis=(0, 2), keepdims=True)
        return ((y - mean) * lax.rsqrt(var + BN_EPS)
                * gamma[None, :, None] + beta[None, :, None])

    lo = bn(conv(params['large_w'], params['large_b'], large_kernel),
            params['large_gamma'], params['large_beta'])
    so = bn(conv(params['small_w'], params['small_b'], small_kernel),
            params['small_gamma'], params['small_beta'])
    return lo + so


if __name__ == "__main__":
    def make_params(key, C_in, C_out, groups, small_kernel, large_kernel):
        ks = jax.random.split(key, 8)
        return {
            'large_w': 0.1 * jax.random.normal(ks[0], (C_out, C_in // groups, large_kernel), jnp.float32),
            'large_b': 0.1 * jax.random.normal(ks[1], (C_out,), jnp.float32),
            'small_w': 0.1 * jax.random.normal(ks[2], (C_out, C_in // groups, small_kernel), jnp.float32),
            'small_b': 0.1 * jax.random.normal(ks[3], (C_out,), jnp.float32),
            'large_gamma': 1.0 + 0.1 * jax.random.normal(ks[4], (C_out,), jnp.float32),
            'large_beta': 0.1 * jax.random.normal(ks[5], (C_out,), jnp.float32),
            'small_gamma': 1.0 + 0.1 * jax.random.normal(ks[6], (C_out,), jnp.float32),
            'small_beta': 0.1 * jax.random.normal(ks[7], (C_out,), jnp.float32),
        }

    key = jax.random.PRNGKey(0)
    k_p1, k_x1, k_p2, k_x2 = jax.random.split(key, 4)
    small_kernel, large_kernel, stride = 3, 11, 1   # DevignModel RepLK hyper-params

    # Config 1: tiny shapes, single L-block, NLC fallback output path.
    N, C_in, C_out, L, groups = 2, 4, 8, 16, 2
    params = make_params(k_p1, C_in, C_out, groups, small_kernel, large_kernel)
    x = jax.random.normal(k_x1, (N, C_in, L), jnp.float32)
    ref = _reference(x, params, small_kernel=small_kernel, large_kernel=large_kernel,
                     stride=stride, groups=groups)

    out32 = jax.block_until_ready(reparam_large_kernel_conv(
        x, params, small_kernel=small_kernel, large_kernel=large_kernel,
        stride=stride, groups=groups, compute_dtype=jnp.float32))
    assert out32.shape == (N, C_out, L), out32.shape
    err32 = jnp.max(jnp.abs(out32 - ref))
    assert jnp.allclose(out32, ref, atol=1e-4, rtol=1e-4), f"f32 mismatch: {err32}"

    outbf = jax.block_until_ready(reparam_large_kernel_conv(
        x, params, small_kernel=small_kernel, large_kernel=large_kernel,
        stride=stride, groups=groups, compute_dtype=jnp.bfloat16))
    errbf = jnp.max(jnp.abs(outbf - ref))
    assert jnp.allclose(outbf, ref, atol=5e-2, rtol=5e-2), f"bf16 mismatch: {errbf}"

    # Config 2: multiple L-blocks, masked tail block, direct-NCL (in-kernel
    # transpose) output path.
    N2, C_in2, C_out2, L2, groups2 = 2, 8, 8, 200, 4
    params2 = make_params(k_p2, C_in2, C_out2, groups2, small_kernel, large_kernel)
    x2 = jax.random.normal(k_x2, (N2, C_in2, L2), jnp.float32)
    ref2 = _reference(x2, params2, small_kernel=small_kernel, large_kernel=large_kernel,
                      stride=stride, groups=groups2)

    out2 = jax.block_until_ready(reparam_large_kernel_conv(
        x2, params2, small_kernel=small_kernel, large_kernel=large_kernel,
        stride=stride, groups=groups2, compute_dtype=jnp.float32, l_block=128))
    assert out2.shape == (N2, C_out2, L2), out2.shape
    err2 = jnp.max(jnp.abs(out2 - ref2))
    assert jnp.allclose(out2, ref2, atol=1e-4, rtol=1e-4), f"tiled f32 mismatch: {err2}"

    out2b = jax.block_until_ready(reparam_large_kernel_conv(
        x2, params2, small_kernel=small_kernel, large_kernel=large_kernel,
        stride=stride, groups=groups2, compute_dtype=jnp.bfloat16, l_block=128))
    err2b = jnp.max(jnp.abs(out2b - ref2))
    assert jnp.allclose(out2b, ref2, atol=5e-2, rtol=5e-2), f"tiled bf16 mismatch: {err2b}"

    print("KERNEL_OK")
</pallas_src>

<mosaic_0001>
module attributes {stable_mosaic.version = 11 : i64} {
  func.func @_conv_stats_kernel(%arg0: i32, %arg1: i32, %arg2: memref<2x32x128xf32, #tpu.memory_space<any>>, %arg3: memref<384x256xf32, #tpu.memory_space<vmem>>, %arg4: memref<1024x128xf32, #tpu.memory_space<vmem>>, %arg5: memref<1x16x128xf32, #tpu.memory_space<vmem>>, %arg6: memref<1x16x128xf32, #tpu.memory_space<vmem>>, %arg7: memref<1x1x8x128xf32, #tpu.memory_space<vmem>>, %arg8: memref<32x128xf32, #tpu.memory_space<vmem>>, %arg9: memref<!tpu.dma_semaphore, #tpu.memory_space<semaphore_mem>>) attributes {dimension_semantics = [#tpu.dimension_semantics<parallel>, #tpu.dimension_semantics<parallel>], iteration_bounds = array<i64: 2, 1>, scalar_prefetch = 0 : i64, scratch_operands = 2 : i64, tpu.core_type = #tpu.core_type<tc>, window_params = [{}, {pipeline_mode = #tpu.pipeline_mode<synchronous>, transform_indices = @transform_1, window_bounds = array<i64: 384, 256>}, {pipeline_mode = #tpu.pipeline_mode<synchronous>, transform_indices = @transform_2, window_bounds = array<i64: 1024, 128>}, {transform_indices = @transform_3, window_bounds = array<i64: 1, 16, 128>}, {transform_indices = @transform_4, window_bounds = array<i64: 1, 16, 128>}, {transform_indices = @transform_5, window_bounds = array<i64: 1, 1, 8, 128>}]} {
    %c16_i32 = arith.constant 16 : i32
    %0 = arith.muli %arg1, %c16_i32 : i32
    %1 = tpu.assume_multiple %0, 8 : i32
    %c0_i32 = arith.constant 0 : i32
    %2 = tpu.memref_slice %arg2[%arg0, %1, %c0_i32] : memref<2x32x128xf32, #tpu.memory_space<any>> -> memref<1x32x128xf32, #tpu.memory_space<any>>
    %3 = tpu.memref_squeeze %2 : memref<1x32x128xf32, #tpu.memory_space<any>> -> memref<32x128xf32, #tpu.memory_space<any>>
    tpu.enqueue_dma source(%3 : memref<32x128xf32, #tpu.memory_space<any>>) target(%arg8 : memref<32x128xf32, #tpu.memory_space<vmem>>) target_semaphore(%arg9 : memref<!tpu.dma_semaphore, #tpu.memory_space<semaphore_mem>>)
    %c0_i32_0 = arith.constant 0 : i32
    %4 = tpu.memref_slice %arg2[%arg0, %1, %c0_i32_0] : memref<2x32x128xf32, #tpu.memory_space<any>> -> memref<1x32x128xf32, #tpu.memory_space<any>>
    %5 = tpu.memref_squeeze %4 : memref<1x32x128xf32, #tpu.memory_space<any>> -> memref<32x128xf32, #tpu.memory_space<any>>
    tpu.wait_dma2 semaphore(%arg9 : memref<!tpu.dma_semaphore, #tpu.memory_space<semaphore_mem>>) src(%5 : memref<32x128xf32, #tpu.memory_space<any>>) dst(%arg8 : memref<32x128xf32, #tpu.memory_space<vmem>>)
    %cst = arith.constant 0.000000e+00 : f32
    %6 = vector.broadcast %cst : f32 to vector<1x128xf32>
    %cst_1 = arith.constant 0.000000e+00 : f32
    %7 = vector.broadcast %cst_1 : f32 to vector<1x128xf32>
    %cst_2 = arith.constant 0.000000e+00 : f32
    %8 = vector.broadcast %cst_2 : f32 to vector<1x128xf32>
    %cst_3 = arith.constant 0.000000e+00 : f32
    %9 = vector.broadcast %cst_3 : f32 to vector<1x128xf32>
    %c4 = arith.constant 4 : index
    %c0 = arith.constant 0 : index
    %10 = vector.load %arg8[%c4, %c0] : memref<32x128xf32, #tpu.memory_space<vmem>>, vector<16x128xf32>
    %c0_4 = arith.constant 0 : index
    %c0_5 = arith.constant 0 : index
    %11 = vector.load %arg3[%c0_4, %c0_5] : memref<384x256xf32, #tpu.memory_space<vmem>>, vector<128x256xf32>
    %cst_6 = arith.constant dense<0.000000e+00> : vector<16x256xf32>
    %12 = tpu.matmul %10, %11, %cst_6 {dimension_numbers = #tpu.dot_dimension_numbers<[1], [0], [0], [1], [0, 0, 1, 1], [], []>} : vector<16x128xf32>, vector<128x256xf32>, vector<16x256xf32> -> vector<16x256xf32>
    %c5 = arith.constant 5 : index
    %c0_7 = arith.constant 0 : index
    %13 = vector.load %arg8[%c5, %c0_7] : memref<32x128xf32, #tpu.memory_space<vmem>>, vector<16x128xf32>
    %c128 = arith.constant 128 : index
    %c0_8 = arith.constant 0 : index
    %14 = vector.load %arg3[%c128, %c0_8] : memref<384x256xf32, #tpu.memory_space<vmem>>, vector<128x256xf32>
    %cst_9 = arith.constant dense<0.000000e+00> : vector<16x256xf32>
    %15 = tpu.matmul %13, %14, %cst_9 {dimension_numbers = #tpu.dot_dimension_numbers<[1], [0], [0], [1], [0, 0, 1, 1], [], []>} : vector<16x128xf32>, vector<128x256xf32>, vector<16x256xf32> -> vector<16x256xf32>
    %16 = arith.addf %12, %15 : vector<16x256xf32>
    %c6 = arith.constant 6 : index
    %c0_10 = arith.constant 0 : index
    %17 = vector.load %arg8[%c6, %c0_10] : memref<32x128xf32, #tpu.memory_space<vmem>>, vector<16x128xf32>
    %c256 = arith.constant 256 : index
    %c0_11 = arith.constant 0 : index
    %18 = vector.load %arg3[%c256, %c0_11] : memref<384x256xf32, #tpu.memory_space<vmem>>, vector<128x256xf32>
    %cst_12 = arith.constant dense<0.000000e+00> : vector<16x256xf32>
    %19 = tpu.matmul %17, %18, %cst_12 {dimension_numbers = #tpu.dot_dimension_numbers<[1], [0], [0], [1], [0, 0, 1, 1], [], []>} : vector<16x128xf32>, vector<128x256xf32>, vector<16x256xf32> -> vector<16x256xf32>
    %20 = arith.addf %16, %19 : vector<16x256xf32>
    %21 = vector.extract_strided_slice %20 {offsets = [0, 128], sizes = [16, 128], strides = [1, 1]} : vector<16x256xf32> to vector<16x128xf32>
    %22 = vector.extract_strided_slice %20 {offsets = [0, 0], sizes = [16, 128], strides = [1, 1]} : vector<16x256xf32> to vector<16x128xf32>
    %c0_13 = arith.constant 0 : index
    %c0_14 = arith.constant 0 : index
    %c0_15 = arith.constant 0 : index
    %23 = vector.load %arg6[%c0_13, %c0_14, %c0_15] : memref<1x16x128xf32, #tpu.memory_space<vmem>>, vector<1x16x128xf32>
    %24 = vector.shape_cast %23 : vector<1x16x128xf32> to vector<16x128xf32>
    %25 = vector.shape_cast %21 : vector<16x128xf32> to vector<1x16x128xf32>
    tpu.vector_store %arg6[%c0_13, %c0_14, %c0_15], %25 {strides = array<i32>} : memref<1x16x128xf32, #tpu.memory_space<vmem>>, vector<1x16x128xf32>,
    %cst_16 = arith.constant dense<0.000000e+00> : vector<128xf32>
    %26 = vector.multi_reduction <add>, %21, %cst_16 [0] : vector<16x128xf32> to vector<128xf32>
    %27 = vector.shape_cast %26 : vector<128xf32> to vector<1x128xf32>
    %28 = arith.addf %8, %27 : vector<1x128xf32>
    %29 = arith.mulf %21, %21 : vector<16x128xf32>
    %cst_17 = arith.constant dense<0.000000e+00> : vector<128xf32>
    %30 = vector.multi_reduction <add>, %29, %cst_17 [0] : vector<16x128xf32> to vector<128xf32>
    %31 = vector.shape_cast %30 : vector<128xf32> to vector<1x128xf32>
    %32 = arith.addf %9, %31 : vector<1x128xf32>
    %c0_18 = arith.constant 0 : index
    %c0_19 = arith.constant 0 : index
    %33 = vector.load %arg8[%c0_18, %c0_19] : memref<32x128xf32, #tpu.memory_space<vmem>>, vector<16x128xf32>
    %c0_20 = arith.constant 0 : index
    %c0_21 = arith.constant 0 : index
    %34 = vector.load %arg4[%c0_20, %c0_21] : memref<1024x128xf32, #tpu.memory_space<vmem>>, vector<128x128xf32>
    %cst_22 = arith.constant dense<0.000000e+00> : vector<16x128xf32>
    %35 = tpu.matmul %33, %34, %cst_22 {dimension_numbers = #tpu.dot_dimension_numbers<[1], [0], [0], [1], [0, 0, 1, 1], [], []>} : vector<16x128xf32>, vector<128x128xf32>, vector<16x128xf32> -> vector<16x128xf32>
    %36 = arith.addf %22, %35 : vector<16x128xf32>
    %c1 = arith.constant 1 : index
    %c0_23 = arith.constant 0 : index
    %37 = vector.load %arg8[%c1, %c0_23] : memref<32x128xf32, #tpu.memory_space<vmem>>, vector<16x128xf32>
    %c128_24 = arith.constant 128 : index
    %c0_25 = arith.constant 0 : index
    %38 = vector.load %arg4[%c128_24, %c0_25] : memref<1024x128xf32, #tpu.memory_space<vmem>>, vector<128x128xf32>
    %cst_26 = arith.constant dense<0.000000e+00> : vector<16x128xf32>
    %39 = tpu.matmul %37, %38, %cst_26 {dimension_numbers = #tpu.dot_dimension_numbers<[1], [0], [0], [1], [0, 0, 1, 1], [], []>} : vector<16x128xf32>, vector<128x128xf32>, vector<16x128xf32> -> vector<16x128xf32>
    %40 = arith.addf %36, %39 : vector<16x128xf32>
    %c2 = arith.constant 2 : index
    %c0_27 = arith.constant 0 : index
    %41 = vector.load %arg8[%c2, %c0_27] : memref<32x128xf32, #tpu.memory_space<vmem>>, vector<16x128xf32>
    %c256_28 = arith.constant 256 : index
    %c0_29 = arith.constant 0 : index
    %42 = vector.load %arg4[%c256_28, %c0_29] : memref<1024x128xf32, #tpu.memory_space<vmem>>, vector<128x128xf32>
    %cst_30 = arith.constant dense<0.000000e+00> : vector<16x128xf32>
    %43 = tpu.matmul %41, %42, %cst_30 {dimension_numbers = #tpu.dot_dimension_numbers<[1], [0], [0], [1], [0, 0, 1, 1], [], []>} : vector<16x128xf32>, vector<128x128xf32>, vector<16x128xf32> -> vector<16x128xf32>
    %44 = arith.addf %40, %43 : vector<16x128xf32>
    %c3 = arith.constant 3 : index
    %c0_31 = arith.constant 0 : index
    %45 = vector.load %arg8[%c3, %c0_31] : memref<32x128xf32, #tpu.memory_space<vmem>>, vector<16x128xf32>
    %c384 = arith.constant 384 : index
    %c0_32 = arith.constant 0 : index
    %46 = vector.load %arg4[%c384, %c0_32] : memref<1024x128xf32, #tpu.memory_space<vmem>>, vector<128x128xf32>
    %cst_33 = arith.constant dense<0.000000e+00> : vector<16x128xf32>
    %47 = tpu.matmul %45, %46, %cst_33 {dimension_numbers = #tpu.dot_dimension_numbers<[1], [0], [0], [1], [0, 0, 1, 1], [], []>} : vector<16x128xf32>, vector<128x128xf32>, vector<16x128xf32> -> vector<16x128xf32>
    %48 = arith.addf %44, %47 : vector<16x128xf32>
    %c7 = arith.constant 7 : index
    %c0_34 = arith.constant 0 : index
    %49 = vector.load %arg8[%c7, %c0_34] : memref<32x128xf32, #tpu.memory_space<vmem>>, vector<16x128xf32>
    %c512 = arith.constant 512 : index
    %c0_35 = arith.constant 0 : index
    %50 = vector.load %arg4[%c512, %c0_35] : memref<1024x128xf32, #tpu.memory_space<vmem>>, vector<128x128xf32>
    %cst_36 = arith.constant dense<0.000000e+00> : vector<16x128xf32>
    %51 = tpu.matmul %49, %50, %cst_36 {dimension_numbers = #tpu.dot_dimension_numbers<[1], [0], [0], [1], [0, 0, 1, 1], [], []>} : vector<16x128xf32>, vector<128x128xf32>, vector<16x128xf32> -> vector<16x128xf32>
    %52 = arith.addf %48, %51 : vector<16x128xf32>
    %c8 = arith.constant 8 : index
    %c0_37 = arith.constant 0 : index
    %53 = vector.load %arg8[%c8, %c0_37] : memref<32x128xf32, #tpu.memory_space<vmem>>, vector<16x128xf32>
    %c640 = arith.constant 640 : index
    %c0_38 = arith.constant 0 : index
    %54 = vector.load %arg4[%c640, %c0_38] : memref<1024x128xf32, #tpu.memory_space<vmem>>, vector<128x128xf32>
    %cst_39 = arith.constant dense<0.000000e+00> : vector<16x128xf32>
    %55 = tpu.matmul %53, %54, %cst_39 {dimension_numbers = #tpu.dot_dimension_numbers<[1], [0], [0], [1], [0, 0, 1, 1], [], []>} : vector<16x128xf32>, vector<128x128xf32>, vector<16x128xf32> -> vector<16x128xf32>
    %56 = arith.addf %52, %55 : vector<16x128xf32>
    %c9 = arith.constant 9 : index
    %c0_40 = arith.constant 0 : index
    %57 = vector.load %arg8[%c9, %c0_40] : memref<32x128xf32, #tpu.memory_space<vmem>>, vector<16x128xf32>
    %c768 = arith.constant 768 : index
    %c0_41 = arith.constant 0 : index
    %58 = vector.load %arg4[%c768, %c0_41] : memref<1024x128xf32, #tpu.memory_space<vmem>>, vector<128x128xf32>
    %cst_42 = arith.constant dense<0.000000e+00> : vector<16x128xf32>
    %59 = tpu.matmul %57, %58, %cst_42 {dimension_numbers = #tpu.dot_dimension_numbers<[1], [0], [0], [1], [0, 0, 1, 1], [], []>} : vector<16x128xf32>, vector<128x128xf32>, vector<16x128xf32> -> vector<16x128xf32>
    %60 = arith.addf %56, %59 : vector<16x128xf32>
    %c10 = arith.constant 10 : index
    %c0_43 = arith.constant 0 : index
    %61 = vector.load %arg8[%c10, %c0_43] : memref<32x128xf32, #tpu.memory_space<vmem>>, vector<16x128xf32>
    %c896 = arith.constant 896 : index
    %c0_44 = arith.constant 0 : index
    %62 = vector.load %arg4[%c896, %c0_44] : memref<1024x128xf32, #tpu.memory_space<vmem>>, vector<128x128xf32>
    %cst_45 = arith.constant dense<0.000000e+00> : vector<16x128xf32>
    %63 = tpu.matmul %61, %62, %cst_45 {dimension_numbers = #tpu.dot_dimension_numbers<[1], [0], [0], [1], [0, 0, 1, 1], [], []>} : vector<16x128xf32>, vector<128x128xf32>, vector<16x128xf32> -> vector<16x128xf32>
    %64 = arith.addf %60, %63 : vector<16x128xf32>
    %c0_46 = arith.constant 0 : index
    %c0_47 = arith.constant 0 : index
    %c0_48 = arith.constant 0 : index
    %65 = vector.load %arg5[%c0_46, %c0_47, %c0_48] : memref<1x16x128xf32, #tpu.memory_space<vmem>>, vector<1x16x128xf32>
    %66 = vector.shape_cast %65 : vector<1x16x128xf32> to vector<16x128xf32>
    %67 = vector.shape_cast %64 : vector<16x128xf32> to vector<1x16x128xf32>
    tpu.vector_store %arg5[%c0_46, %c0_47, %c0_48], %67 {strides = array<i32>} : memref<1x16x128xf32, #tpu.memory_space<vmem>>, vector<1x16x128xf32>,
    %cst_49 = arith.constant dense<0.000000e+00> : vector<128xf32>
    %68 = vector.multi_reduction <add>, %64, %cst_49 [0] : vector<16x128xf32> to vector<128xf32>
    %69 = vector.shape_cast %68 : vector<128xf32> to vector<1x128xf32>
    %70 = arith.addf %6, %69 : vector<1x128xf32>
    %71 = arith.mulf %64, %64 : vector<16x128xf32>
    %cst_50 = arith.constant dense<0.000000e+00> : vector<128xf32>
    %72 = vector.multi_reduction <add>, %71, %cst_50 [0] : vector<16x128xf32> to vector<128xf32>
    %73 = vector.shape_cast %72 : vector<128xf32> to vector<1x128xf32>
    %74 = arith.addf %7, %73 : vector<1x128xf32>
    %cst_51 = arith.constant 0.000000e+00 : f32
    %75 = vector.broadcast %cst_51 : f32 to vector<4x128xf32>
    %76 = tpu.concatenate %70, %74, %28, %32, %75 in 0 : vector<1x128xf32>, vector<1x128xf32>, vector<1x128xf32>, vector<1x128xf32>, vector<4x128xf32> -> vector<8x128xf32>
    %c0_52 = arith.constant 0 : index
    %c0_53 = arith.constant 0 : index
    %c0_54 = arith.constant 0 : index
    %c0_55 = arith.constant 0 : index
    %77 = vector.load %arg7[%c0_52, %c0_53, %c0_54, %c0_55] : memref<1x1x8x128xf32, #tpu.memory_space<vmem>>, vector<1x1x8x128xf32>
    %78 = vector.shape_cast %77 : vector<1x1x8x128xf32> to vector<8x128xf32>
    %79 = vector.shape_cast %76 : vector<8x128xf32> to vector<1x1x8x128xf32>
    tpu.vector_store %arg7[%c0_52, %c0_53, %c0_54, %c0_55], %79 {strides = array<i32>} : memref<1x1x8x128xf32, #tpu.memory_space<vmem>>, vector<1x1x8x128xf32>,
    return
  }
  func.func @transform_1(%arg0: i32, %arg1: i32) -> (i32, i32) {
    %c0_i32 = arith.constant 0 : i32
    %c0_i32_0 = arith.constant 0 : i32
    %c0_i32_1 = arith.constant 0 : i32
    return %c0_i32, %c0_i32_0 : i32, i32
  }
  func.func @transform_2(%arg0: i32, %arg1: i32) -> (i32, i32) {
    %c0_i32 = arith.constant 0 : i32
    %c0_i32_0 = arith.constant 0 : i32
    %c0_i32_1 = arith.constant 0 : i32
    return %c0_i32, %c0_i32_0 : i32, i32
  }
  func.func @transform_3(%arg0: i32, %arg1: i32) -> (i32, i32, i32) {
    %c0_i32 = arith.constant 0 : i32
    %c0_i32_0 = arith.constant 0 : i32
    return %arg0, %arg1, %c0_i32 : i32, i32, i32
  }
  func.func @transform_4(%arg0: i32, %arg1: i32) -> (i32, i32, i32) {
    %c0_i32 = arith.constant 0 : i32
    %c0_i32_0 = arith.constant 0 : i32
    return %arg0, %arg1, %c0_i32 : i32, i32, i32
  }
  func.func @transform_5(%arg0: i32, %arg1: i32) -> (i32, i32, i32, i32) {
    %c0_i32 = arith.constant 0 : i32
    %c0_i32_0 = arith.constant 0 : i32
    %c0_i32_1 = arith.constant 0 : i32
    return %arg0, %arg1, %c0_i32, %c0_i32_0 : i32, i32, i32, i32
  }
}

</mosaic_0001>

<llo_original>
// kernel: tpu_custom_call.1
$region0: #{tpu_custom_call.1}
  #allocation0 [shape = 'u32[]', space=smem, size = 0x4, offset = 0x4, fixed_abs, tag = 'smem constant byte address 0x4 - core index']
  #allocation1 [shape = 'u32[144,128]{1,0:T(1,128)}', space=vmem, size = 0x12000, scoped, tag = 'internal scratch']
  #allocation2 [shape = 'f32[32,128]{1,0:T(8,128)}', space=vmem, size = 0x4000, scoped, tag = 'scratch operand']
  #allocation3 [shape = 's32[1]{0}', space=sflag, size = 0x4, scoped, tag = 'scratch operand']
  #allocation13 [shape = 's32[]', space=sflag, size = 0x4, offset = 0, fixed_abs, tag = 'sflag constant byte address 0x0 - dummy sync flag']
  #allocation14 [shape = 's32[]', space=sflag, size = 0x4, offset = 0, fixed_abs, tag = 'sflag constant byte address 0x0 - dummy sync flag']
  #allocation15 [shape = 'u32[]', space=smem, size = 0x4, offset = 0x44, fixed_abs, tag = 'smem constant byte address 0x44 - assertion arg 0']
  #allocation16 [shape = 'u32[]', space=smem, size = 0x4, offset = 0x48, fixed_abs, tag = 'smem constant byte address 0x48 - assertion arg 1']
  %s0 = inlined_call_operand.hbm [shape: f32[2,32,128], index: 0, kind: input, shape index: {}]
  %s1 = inlined_call_operand.hbm [shape: f32[384,256], index: 1, kind: input, shape index: {}]
  %s2 = inlined_call_operand.hbm [shape: f32[1024,128], index: 2, kind: input, shape index: {}]
  %s3 = inlined_call_operand.hbm [shape: f32[2,16,128], index: 3, kind: output, shape index: {0}]
  %s4 = inlined_call_operand.hbm [shape: f32[2,16,128], index: 4, kind: output, shape index: {1}]
  %s5 = inlined_call_operand.hbm [shape: f32[2,1,8,128], index: 5, kind: output, shape index: {2}]
  %6 = xla_tuple %s3, %s4, %s5
  %s7 = sld [smem:[#allocation0]]
  $region69: #{tpu_custom_call.1} parent=0
    _
  %s9 = ssub.s32 1, %s7
  %s10 = scalar_select 0, %s9, %s7
  $region1: #{tpu_custom_call.1} parent=0
    #allocation4 [shape = 'u8[393216]{0}', space=vmem, size = 0x60000, scoped, tag = 'input window, operand 1, single buffered']
    #allocation5 [shape = 's32[2]{0}', space=sflag, size = 0x8, scoped, tag = 'scoped memory for tpu_custom_call.1']
    #allocation6 [shape = 's32[2]{0}', space=sflag, size = 0x8, scoped, tag = 'scoped memory for tpu_custom_call.1']
    #allocation7 [shape = 'u8[524288]{0}', space=vmem, size = 0x80000, scoped, tag = 'input window, operand 2, single buffered']
    #allocation8 [shape = 's32[1]{0}', space=sflag, size = 0x4, scoped, tag = 'scoped memory for tpu_custom_call.1']
    #allocation9 [shape = 'u8[16384]{0}', space=vmem, size = 0x4000, scoped, tag = 'output window, operand 0']
    #allocation10 [shape = 'u8[16384]{0}', space=vmem, size = 0x4000, scoped, tag = 'output window, operand 1']
    #allocation11 [shape = 's32[2]{0}', space=sflag, size = 0x8, scoped, tag = 'scoped memory for tpu_custom_call.1']
    #allocation12 [shape = 'u8[8192]{0}', space=vmem, size = 0x2000, scoped, tag = 'output window, operand 2']
    %11 = vsyncpa [#allocation5], 0
    %12 = vsyncpa [#allocation8], 0
    %13 = vsyncpa [#allocation6], 0
    %s14 = scalar_lea.sflag [#allocation6], 1
    %15 = vsyncpa %s14, 0
    %16 = vsyncpa [#allocation11], 0
    %s17 = scalar_lea.sflag [#allocation11], 1
    %18 = vsyncpa %s17, 0
    loop: start=0, step=1, limit=4
    $region2: #{tpu_custom_call.1} parent=1 // loop_pre_header
      _
    $region3: #{tpu_custom_call.1} parent=1 // loop_header
      %s20 = sphi 0, %s24
      %p21 = scmp.ge.s32.totalorder %s20, 4
      %s27 = sphi 0, %s39
      %s28 = sphi 0, %s35
      %s29 = sphi 0, %s27
      %s30 = sphi 0, %s28
      %s31 = sphi 0, %s29
      %s32 = sphi 0, %s30
      %s40 = sphi 0, %s40
      %s42 = sphi 0, %s40
      %s43 = sphi 0, %s42
      %s57 = sphi 0, %s43
      %s61 = sphi 0, %s61
      %s63 = sphi 0, %s61
      %s64 = sphi 0, %s63
      %s78 = sphi 0, %s64
      %s86 = sphi 0, %s88
      %s89 = sphi 0, %s86
      %s90 = sphi 0, %s89
      %s106 = sphi 0, %s90
      %s114 = sphi 0, %s116
      %s117 = sphi 0, %s114
      %s118 = sphi 0, %s117
      %s134 = sphi 0, %s118
      %s142 = sphi 0, %s144
      %s145 = sphi 0, %s142
      %s146 = sphi 0, %s145
      %s162 = sphi 0, %s146
    $region4: #{tpu_custom_call.1} parent=1 // loop_header_branch
      %23 = sbr.rel (%p21) target = $region8
    $region5: #{tpu_custom_call.1} parent=1 // loop_body
      %s25 = ssub.s32 %s20, 1
      %s26 = ssub.s32 %s20, 2
      %s33 = sadd.s32 1, %s28
      %p34 = scmp.ge.s32.totalorder %s33, 1
      %s35 = scalar_select %p34, 0, %s33
      %s36 = sadd.s32 1, %s27
      %s37 = scalar_select %p34, %s36, %s27
      %p38 = scmp.ge.s32.totalorder %s37, 2
      %s39 = scalar_select %p38, 0, %s37
      %s41 = sadd.s32 %s40, 1
      %p44 = scmp.eq.s32.totalorder %s20, 1
      %p45 = scmp.ne.s32.totalorder %s40, %s42
      %p46 = scmp.eq.s32.totalorder %s20, 0
      %p47 = por %p45, %p46
      %p48 = scmp.ne.s32.totalorder %s40, %s42
      %p49 = scmp.eq.s32.totalorder %s25, 1
      %p50 = por %p48, %p49
      %p51 = scmp.ne.s32.totalorder %s42, %s43
      %p52 = scmp.eq.s32.totalorder %s25, 0
      %p53 = por %p51, %p52
      %p54 = scmp.ne.s32.totalorder %s42, %s43
      %p55 = scmp.eq.s32.totalorder %s26, 1
      %p56 = por %p54, %p55
      %p58 = scmp.ne.s32.totalorder %s43, %s57
      %p59 = scmp.eq.s32.totalorder %s26, 0
      %p60 = por %p58, %p59
      %s62 = sadd.s32 %s61, 1
      %p65 = scmp.eq.s32.totalorder %s20, 1
      %p66 = scmp.ne.s32.totalorder %s61, %s63
      %p67 = scmp.eq.s32.totalorder %s20, 0
      %p68 = por %p66, %p67
      %p69 = scmp.ne.s32.totalorder %s61, %s63
      %p70 = scmp.eq.s32.totalorder %s25, 1
      %p71 = por %p69, %p70
      %p72 = scmp.ne.s32.totalorder %s63, %s64
      %p73 = scmp.eq.s32.totalorder %s25, 0
      %p74 = por %p72, %p73
      %p75 = scmp.ne.s32.totalorder %s63, %s64
      %p76 = scmp.eq.s32.totalorder %s26, 1
      %p77 = por %p75, %p76
      %p79 = scmp.ne.s32.totalorder %s64, %s78
      %p80 = scmp.eq.s32.totalorder %s26, 0
      %p81 = por %p79, %p80
      %s82 = ssub.s32 %s27, %s39
      %s83 = ssub.s32 %s28, %s35
      %s84 = sor.u32 %s82, %s83
      %p85 = scmp.eq.s32.totalorder %s84, 0
      %s87 = sadd.s32 %s86, 1
      %s88 = scalar_select %p85, %s86, %s87
      %p91 = pneg %p85
      %p92 = scmp.eq.s32.totalorder %s20, 1
      %p93 = por %p91, %p92
      %p94 = scmp.ne.s32.totalorder %s86, %s89
      %p95 = scmp.eq.s32.totalorder %s20, 0
      %p96 = por %p94, %p95
      %p97 = scmp.ne.s32.totalorder %s86, %s89
      %p98 = scmp.eq.s32.totalorder %s25, 1
      %p99 = por %p97, %p98
      %p100 = scmp.ne.s32.totalorder %s89, %s90
      %p101 = scmp.eq.s32.totalorder %s25, 0
      %p102 = por %p100, %p101
      %p103 = scmp.ne.s32.totalorder %s89, %s90
      %p104 = scmp.eq.s32.totalorder %s26, 1
      %p105 = por %p103, %p104
      %p107 = scmp.ne.s32.totalorder %s90, %s106
      %p108 = scmp.eq.s32.totalorder %s26, 0
      %p109 = por %p107, %p108
      %s110 = ssub.s32 %s27, %s39
      %s111 = ssub.s32 %s28, %s35
      %s112 = sor.u32 %s110, %s111
      %p113 = scmp.eq.s32.totalorder %s112, 0
      %s115 = sadd.s32 %s114, 1
      %s116 = scalar_select %p113, %s114, %s115
      %p119 = pneg %p113
      %p120 = scmp.eq.s32.totalorder %s20, 1
      %p121 = por %p119, %p120
      %p122 = scmp.ne.s32.totalorder %s114, %s117
      %p123 = scmp.eq.s32.totalorder %s20, 0
      %p124 = por %p122, %p123
      %p125 = scmp.ne.s32.totalorder %s114, %s117
      %p126 = scmp.eq.s32.totalorder %s25, 1
      %p127 = por %p125, %p126
      %p128 = scmp.ne.s32.totalorder %s117, %s118
      %p129 = scmp.eq.s32.totalorder %s25, 0
      %p130 = por %p128, %p129
      %p131 = scmp.ne.s32.totalorder %s117, %s118
      %p132 = scmp.eq.s32.totalorder %s26, 1
      %p133 = por %p131, %p132
      %p135 = scmp.ne.s32.totalorder %s118, %s134
      %p136 = scmp.eq.s32.totalorder %s26, 0
      %p137 = por %p135, %p136
      %s138 = ssub.s32 %s27, %s39
      %s139 = ssub.s32 %s28, %s35
      %s140 = sor.u32 %s138, %s139
      %p141 = scmp.eq.s32.totalorder %s140, 0
      %s143 = sadd.s32 %s142, 1
      %s144 = scalar_select %p141, %s142, %s143
      %p147 = pneg %p141
      %p148 = scmp.eq.s32.totalorder %s20, 1
      %p149 = por %p147, %p148
      %p150 = scmp.ne.s32.totalorder %s142, %s145
      %p151 = scmp.eq.s32.totalorder %s20, 0
      %p152 = por %p150, %p151
      %p153 = scmp.ne.s32.totalorder %s142, %s145
      %p154 = scmp.eq.s32.totalorder %s25, 1
      %p155 = por %p153, %p154
      %p156 = scmp.ne.s32.totalorder %s145, %s146
      %p157 = scmp.eq.s32.totalorder %s25, 0
      %p158 = por %p156, %p157
      %p159 = scmp.ne.s32.totalorder %s145, %s146
      %p160 = scmp.eq.s32.totalorder %s26, 1
      %p161 = por %p159, %p160
      %p163 = scmp.ne.s32.totalorder %s146, %s162
      %p164 = scmp.eq.s32.totalorder %s26, 0
      %p165 = por %p163, %p164
      %p166 = scmp.le.s32.totalorder 1, %s20
      %p167 = scmp.lt.s32.totalorder %s20, 3
      %p168 = pnand %p166, %p167
      %p169 = pneg %p168
      // Predicated region
      $region9: #{tpu_custom_call.1} parent=5 // pred_check
        _
      $region10: #{tpu_custom_call.1} parent=5 // pred_check_branch
        %171 = sbr.rel (%p168) target = $region12
      $region11: #{tpu_custom_call.1} parent=5 // pred_region
        %s172 = ssub.s32 %s20, 1
        // Predicated region
        $region13: #{tpu_custom_call.1} parent=11 // pred_check
          %p173 = pneg %p53
        $region14: #{tpu_custom_call.1} parent=11 // pred_check_branch
          %175 = sbr.rel (%p173) target = $region16
        $region15: #{tpu_custom_call.1} parent=11 // pred_region
          %s177 = ssub.s32 12288, 12288
          %178 = vsyncadd [#allocation5], %s177
          %s179 = sshll.u32 [#allocation4], 4
          %s180 = int_to_ptr.vmem [resolvable:$true] %s179
          %185 = dma.hbm_to_vmem [thread:$0]  %s1, 12288, %s180, [#allocation5], 256, 256, 16
        $region16: #{tpu_custom_call.1} parent=11 // pred_fallthru
          _
        // Predicated region
        $region17: #{tpu_custom_call.1} parent=11 // pred_check
          %p186 = pneg %p74
        $region18: #{tpu_custom_call.1} parent=11 // pred_check_branch
          %188 = sbr.rel (%p186) target = $region20
        $region19: #{tpu_custom_call.1} parent=11 // pred_region
          %s190 = ssub.s32 16384, 16384
          %191 = vsyncadd [#allocation8], %s190
          %s192 = sshll.u32 [#allocation7], 4
          %s193 = int_to_ptr.vmem [resolvable:$true] %s192
          %198 = dma.hbm_to_vmem [thread:$0]  %s2, 16384, %s193, [#allocation8], 128, 128, 8
        $region20: #{tpu_custom_call.1} parent=11 // pred_fallthru
          _
      $region12: #{tpu_custom_call.1} parent=5 // pred_fallthru
        _
      %p199 = scmp.lt.s32.totalorder %s20, 2
      // Predicated region
      $region21: #{tpu_custom_call.1} parent=5 // pred_check
        %p200 = pneg %p199
      $region22: #{tpu_custom_call.1} parent=5 // pred_check_branch
        %202 = sbr.rel (%p200) target = $region24
      $region23: #{tpu_custom_call.1} parent=5 // pred_region
        _
      $region24: #{tpu_custom_call.1} parent=5 // pred_fallthru
        _
      %p203 = scmp.le.s32.totalorder 1, %s20
      %p204 = scmp.lt.s32.totalorder %s20, 3
      %p205 = pnand %p203, %p204
      %p206 = pneg %p205
      // Predicated region
      $region25: #{tpu_custom_call.1} parent=5 // pred_check
        _
      $region26: #{tpu_custom_call.1} parent=5 // pred_check_branch
        %208 = sbr.rel (%p205) target = $region28
      $region27: #{tpu_custom_call.1} parent=5 // pred_region
        %s209 = ssub.s32 %s20, 1
        // Predicated region
        $region29: #{tpu_custom_call.1} parent=27 // pred_check
          %p210 = pneg %p53
        $region30: #{tpu_custom_call.1} parent=27 // pred_check_branch
          %212 = sbr.rel (%p210) target = $region32
        $region31: #{tpu_custom_call.1} parent=27 // pred_region
          %213 = dma.done [#allocation5], 12288
        $region32: #{tpu_custom_call.1} parent=27 // pred_fallthru
          _
        // Predicated region
        $region33: #{tpu_custom_call.1} parent=27 // pred_check
          %p214 = pneg %p74
        $region34: #{tpu_custom_call.1} parent=27 // pred_check_branch
          %216 = sbr.rel (%p214) target = $region36
        $region35: #{tpu_custom_call.1} parent=27 // pred_region
          %217 = dma.done [#allocation8], 16384
        $region36: #{tpu_custom_call.1} parent=27 // pred_fallthru
          _
        %p218 = pneg %p53
        %p219 = pneg %p50
        %p220 = pneg %p74
        %p221 = pneg %p71
        %p222 = pneg %p102
        %p223 = pneg %p99
        %s224 = sand.u32 %s89, 1
        %s225 = scalar_lea.sflag [#allocation6], %s224
        %s226 = sand.u32 %s89, 1
        %s227 = smul.addr %s226, 16
        %s228 = scalar_lea.vmem [#allocation9], %s227
        %p229 = pneg %p130
        %p230 = pneg %p127
        %s231 = sand.u32 %s25, 1
        %s232 = scalar_lea.sflag [#allocation11], %s231
        %s233 = sand.u32 %s117, 1
        %s234 = smul.addr %s233, 16
        %s235 = scalar_lea.vmem [#allocation10], %s234
        %p236 = pneg %p158
        %p237 = pneg %p155
        %s238 = sand.u32 %s25, 1
        %s239 = scalar_lea.sflag [#allocation11], %s238
        %s240 = sand.u32 %s145, 1
        %s241 = smul.addr %s240, 8
        %s242 = scalar_lea.vmem [#allocation12], %s241
        %s243 = smul.u32 2, %s30
        %s244 = smul.u32 2, %s30
        %s245 = smul.u32 %s30, 16
        %s246 = smul.u32 %s29, 32
        %s247 = sadd.s32 %s245, %s246
        %s248 = smul.addr %s247, 16
        %s249 = scalar_lea.hbm %s0, %s248
        // Predicated region
        $region37: #{tpu_custom_call.1} parent=27 // pred_check
          _
        $region38: #{tpu_custom_call.1} parent=27 // pred_check_branch
          %251 = sbr.rel target = $region40
        $region39: #{tpu_custom_call.1} parent=27 // pred_region
          %252 = sst [smem:[#allocation15]] [#allocation14]
          %253 = sst [smem:[#allocation16]] [#allocation13]
        $region40: #{tpu_custom_call.1} parent=27 // pred_fallthru
          _
        %255 = shalt.err (0)
        %s257 = sshll.u32 [#allocation2], 4
        %s258 = int_to_ptr.vmem [resolvable:$true] %s257
        %260 = dma.hbm_to_vmem [thread:$0]  %s249, 512, %s258, [#allocation3]
        %s261 = smul.u32 32, 1
        %s262 = sshll.u32 %s261, 4
        %263 = dma.done [#allocation3], %s262
        %v264 = vld [vmem:[#allocation2 + $0x4] sm:$0xff]
        %v265 = vld [vmem:[#allocation2 + $0xc] sm:$0xff]
        %v266 = vld [vmem:[#allocation4] sm:$0xff]
        %v267 = vld [vmem:[#allocation4 + $0x8] sm:$0xff]
        %v268 = vld [vmem:[#allocation4 + $0x10] sm:$0xff]
        %v269 = vld [vmem:[#allocation4 + $0x18] sm:$0xff]
        %v270 = vld [vmem:[#allocation4 + $0x20] sm:$0xff]
        %v271 = vld [vmem:[#allocation4 + $0x28] sm:$0xff]
        %v272 = vld [vmem:[#allocation4 + $0x30] sm:$0xff]
        %v273 = vld [vmem:[#allocation4 + $0x38] sm:$0xff]
        %v274 = vld [vmem:[#allocation4 + $0x40] sm:$0xff]
        %v275 = vld [vmem:[#allocation4 + $0x48] sm:$0xff]
        %v276 = vld [vmem:[#allocation4 + $0x50] sm:$0xff]
        %v277 = vld [vmem:[#allocation4 + $0x58] sm:$0xff]
        %v278 = vld [vmem:[#allocation4 + $0x60] sm:$0xff]
        %v279 = vld [vmem:[#allocation4 + $0x68] sm:$0xff]
        %v280 = vld [vmem:[#allocation4 + $0x70] sm:$0xff]
        %v281 = vld [vmem:[#allocation4 + $0x78] sm:$0xff]
        %v282 = vld [vmem:[#allocation4 + $0x80] sm:$0xff]
        %v283 = vld [vmem:[#allocation4 + $0x88] sm:$0xff]
        %v284 = vld [vmem:[#allocation4 + $0x90] sm:$0xff]
        %v285 = vld [vmem:[#allocation4 + $0x98] sm:$0xff]
        %v286 = vld [vmem:[#allocation4 + $0xa0] sm:$0xff]
        %v287 = vld [vmem:[#allocation4 + $0xa8] sm:$0xff]
        %v288 = vld [vmem:[#allocation4 + $0xb0] sm:$0xff]
        %v289 = vld [vmem:[#allocation4 + $0xb8] sm:$0xff]
        %v290 = vld [vmem:[#allocation4 + $0xc0] sm:$0xff]
        %v291 = vld [vmem:[#allocation4 + $0xc8] sm:$0xff]
        %v292 = vld [vmem:[#allocation4 + $0xd0] sm:$0xff]
        %v293 = vld [vmem:[#allocation4 + $0xd8] sm:$0xff]
        %v294 = vld [vmem:[#allocation4 + $0xe0] sm:$0xff]
        %v295 = vld [vmem:[#allocation4 + $0xe8] sm:$0xff]
        %v296 = vld [vmem:[#allocation4 + $0xf0] sm:$0xff]
        %v297 = vld [vmem:[#allocation4 + $0xf8] sm:$0xff]
        %v298 = vld [vmem:[#allocation2 + $0x5] sm:$0xff]
        %v299 = vld [vmem:[#allocation2 + $0xd] sm:$0xff]
        %v300 = vld [vmem:[#allocation4 + $0x100] sm:$0xff]
        %v301 = vld [vmem:[#allocation4 + $0x108] sm:$0xff]
        %v302 = vld [vmem:[#allocation4 + $0x110] sm:$0xff]
        %v303 = vld [vmem:[#allocation4 + $0x118] sm:$0xff]
        %v304 = vld [vmem:[#allocation4 + $0x120] sm:$0xff]
        %v305 = vld [vmem:[#allocation4 + $0x128] sm:$0xff]
        %v306 = vld [vmem:[#allocation4 + $0x130] sm:$0xff]
        %v307 = vld [vmem:[#allocation4 + $0x138] sm:$0xff]
        %v308 = vld [vmem:[#allocation4 + $0x140] sm:$0xff]
        %v309 = vld [vmem:[#allocation4 + $0x148] sm:$0xff]
        %v310 = vld [vmem:[#allocation4 + $0x150] sm:$0xff]
        %v311 = vld [vmem:[#allocation4 + $0x158] sm:$0xff]
        %v312 = vld [vmem:[#allocation4 + $0x160] sm:$0xff]
        %v313 = vld [vmem:[#allocation4 + $0x168] sm:$0xff]
        %v314 = vld [vmem:[#allocation4 + $0x170] sm:$0xff]
        %v315 = vld [vmem:[#allocation4 + $0x178] sm:$0xff]
        %v316 = vld [vmem:[#allocation4 + $0x180] sm:$0xff]
        %v317 = vld [vmem:[#allocation4 + $0x188] sm:$0xff]
        %v318 = vld [vmem:[#allocation4 + $0x190] sm:$0xff]
        %v319 = vld [vmem:[#allocation4 + $0x198] sm:$0xff]
        %v320 = vld [vmem:[#allocation4 + $0x1a0] sm:$0xff]
        %v321 = vld [vmem:[#allocation4 + $0x1a8] sm:$0xff]
        %v322 = vld [vmem:[#allocation4 + $0x1b0] sm:$0xff]
        %v323 = vld [vmem:[#allocation4 + $0x1b8] sm:$0xff]
        %v324 = vld [vmem:[#allocation4 + $0x1c0] sm:$0xff]
        %v325 = vld [vmem:[#allocation4 + $0x1c8] sm:$0xff]
        %v326 = vld [vmem:[#allocation4 + $0x1d0] sm:$0xff]
        %v327 = vld [vmem:[#allocation4 + $0x1d8] sm:$0xff]
        %v328 = vld [vmem:[#allocation4 + $0x1e0] sm:$0xff]
        %v329 = vld [vmem:[#allocation4 + $0x1e8] sm:$0xff]
        %v330 = vld [vmem:[#allocation4 + $0x1f0] sm:$0xff]
        %v331 = vld [vmem:[#allocation4 + $0x1f8] sm:$0xff]
        %332 = vmatprep.subr.mxu0 %v301
        %333 = vmatpush1.msra.mxu0 %v300
        %334 = vmatprep.subr.mxu0 %v303
        %335 = vmatpush1.msra.mxu0 %v302
        %336 = vmatprep.subr.mxu0 %v305
        %337 = vmatpush1.msra.mxu0 %v304
        %338 = vmatprep.subr.mxu0 %v307
        %339 = vmatpush1.msra.mxu0 %v306
        %340 = vmatprep.subr.mxu0 %v309
        %341 = vmatpush1.msra.mxu0 %v308
        %342 = vmatprep.subr.mxu0 %v311
        %343 = vmatpush1.msra.mxu0 %v310
        %344 = vmatprep.subr.mxu0 %v313
        %345 = vmatpush1.msra.mxu0 %v312
        %346 = vmatprep.subr.mxu0 %v315
        %347 = vmatpush1.msra.mxu0 %v314
        %348 = vmatprep.subr.mxu0 %v317
        %349 = vmatpush1.msra.mxu0 %v316
        %350 = vmatprep.subr.mxu0 %v319
        %351 = vmatpush1.msra.mxu0 %v318
        %352 = vmatprep.subr.mxu0 %v321
        %353 = vmatpush1.msra.mxu0 %v320
        %354 = vmatprep.subr.mxu0 %v323
        %355 = vmatpush1.msra.mxu0 %v322
        %356 = vmatprep.subr.mxu0 %v325
        %357 = vmatpush1.msra.mxu0 %v324
        %358 = vmatprep.subr.mxu0 %v327
        %359 = vmatpush1.msra.mxu0 %v326
        %360 = vmatprep.subr.mxu0 %v329
        %361 = vmatpush1.msra.mxu0 %v328
        %362 = vmatprep.subr.mxu0 %v331
        %363 = vmatpush1.msra.mxu0 %v330
        %364 = vmatprep.subr.mxu0 0.0
        %365 = vmatpush1.msra.mxu0 0.0
        %366 = vmatprep.subr.mxu0 0.0
        %367 = vmatpush1.msra.mxu0 0.0
        %368 = vmatprep.subr.mxu0 0.0
        %369 = vmatpush1.msra.mxu0 0.0
        %370 = vmatprep.subr.mxu0 0.0
        %371 = vmatpush1.msra.mxu0 0.0
        %372 = vmatprep.subr.mxu0 0.0
        %373 = vmatpush1.msra.mxu0 0.0
        %374 = vmatprep.subr.mxu0 0.0
        %375 = vmatpush1.msra.mxu0 0.0
        %376 = vmatprep.subr.mxu0 0.0
        %377 = vmatpush1.msra.mxu0 0.0
        %378 = vmatprep.subr.mxu0 0.0
        %379 = vmatpush1.msra.mxu0 0.0
        %380 = vmatprep.subr.mxu0 0.0
        %381 = vmatpush1.msra.mxu0 0.0
        %382 = vmatprep.subr.mxu0 0.0
        %383 = vmatpush1.msra.mxu0 0.0
        %384 = vmatprep.subr.mxu0 0.0
        %385 = vmatpush1.msra.mxu0 0.0
        %386 = vmatprep.subr.mxu0 0.0
        %387 = vmatpush1.msra.mxu0 0.0
        %388 = vmatprep.subr.mxu0 0.0
        %389 = vmatpush1.msra.mxu0 0.0
        %390 = vmatprep.subr.mxu0 0.0
        %391 = vmatpush1.msra.mxu0 0.0
        %392 = vmatprep.subr.mxu0 0.0
        %393 = vmatpush1.msra.mxu0 0.0
        %394 = vmatprep.subr.mxu0 0.0
        %395 = vmatpush1.msra.mxu0 0.0
        %396 = vmatprep.mubr.f32.mxu0 0.0
        %397 = vmatmul.mubr.f32.gmra.mrb[0].mxu0 %v298
        %v398 = vpop.f32.mrb[0].mxu0
        %v399 = vadd.f32 0.0, %v398
        %v400 = vpop.f32.mrb[0].mxu0
        %v401 = vadd.f32 0.0, %v400
        %402 = vmatprep.mubr.f32.mxu0 0.0
        %403 = vmatmul.mubr.f32.gmra.mrb[0].mxu0 %v299
        %v404 = vpop.f32.mrb[0].mxu0
        %v405 = vadd.f32 0.0, %v404
        %v406 = vpop.f32.mrb[0].mxu0
        %v407 = vadd.f32 0.0, %v406
        %408 = vdwg.mxu0
        %409 = vmatprep.subr.mxu0 %v267
        %410 = vmatpush1.msra.mxu0 %v266
        %411 = vmatprep.subr.mxu0 %v269
        %412 = vmatpush1.msra.mxu0 %v268
        %413 = vmatprep.subr.mxu0 %v271
        %414 = vmatpush1.msra.mxu0 %v270
        %415 = vmatprep.subr.mxu0 %v273
        %416 = vmatpush1.msra.mxu0 %v272
        %417 = vmatprep.subr.mxu0 %v275
        %418 = vmatpush1.msra.mxu0 %v274
        %419 = vmatprep.subr.mxu0 %v277
        %420 = vmatpush1.msra.mxu0 %v276
        %421 = vmatprep.subr.mxu0 %v279
        %422 = vmatpush1.msra.mxu0 %v278
        %423 = vmatprep.subr.mxu0 %v281
        %424 = vmatpush1.msra.mxu0 %v280
        %425 = vmatprep.subr.mxu0 %v283
        %426 = vmatpush1.msra.mxu0 %v282
        %427 = vmatprep.subr.mxu0 %v285
        %428 = vmatpush1.msra.mxu0 %v284
        %429 = vmatprep.subr.mxu0 %v287
        %430 = vmatpush1.msra.mxu0 %v286
        %431 = vmatprep.subr.mxu0 %v289
        %432 = vmatpush1.msra.mxu0 %v288
        %433 = vmatprep.subr.mxu0 %v291
        %434 = vmatpush1.msra.mxu0 %v290
        %435 = vmatprep.subr.mxu0 %v293
        %436 = vmatpush1.msra.mxu0 %v292
        %437 = vmatprep.subr.mxu0 %v295
        %438 = vmatpush1.msra.mxu0 %v294
        %439 = vmatprep.subr.mxu0 %v297
        %440 = vmatpush1.msra.mxu0 %v296
        %441 = vmatprep.subr.mxu0 0.0
        %442 = vmatpush1.msra.mxu0 0.0
        %443 = vmatprep.subr.mxu0 0.0
        %444 = vmatpush1.msra.mxu0 0.0
        %445 = vmatprep.subr.mxu0 0.0
        %446 = vmatpush1.msra.mxu0 0.0
        %447 = vmatprep.subr.mxu0 0.0
        %448 = vmatpush1.msra.mxu0 0.0
        %449 = vmatprep.subr.mxu0 0.0
        %450 = vmatpush1.msra.mxu0 0.0
        %451 = vmatprep.subr.mxu0 0.0
        %452 = vmatpush1.msra.mxu0 0.0
        %453 = vmatprep.subr.mxu0 0.0
        %454 = vmatpush1.msra.mxu0 0.0
        %455 = vmatprep.subr.mxu0 0.0
        %456 = vmatpush1.msra.mxu0 0.0
        %457 = vmatprep.subr.mxu0 0.0
        %458 = vmatpush1.msra.mxu0 0.0
        %459 = vmatprep.subr.mxu0 0.0
        %460 = vmatpush1.msra.mxu0 0.0
        %461 = vmatprep.subr.mxu0 0.0
        %462 = vmatpush1.msra.mxu0 0.0
        %463 = vmatprep.subr.mxu0 0.0
        %464 = vmatpush1.msra.mxu0 0.0
        %465 = vmatprep.subr.mxu0 0.0
        %466 = vmatpush1.msra.mxu0 0.0
        %467 = vmatprep.subr.mxu0 0.0
        %468 = vmatpush1.msra.mxu0 0.0
        %469 = vmatprep.subr.mxu0 0.0
        %470 = vmatpush1.msra.mxu0 0.0
        %471 = vmatprep.subr.mxu0 0.0
        %472 = vmatpush1.msra.mxu0 0.0
        %473 = vmatprep.mubr.f32.mxu0 0.0
        %474 = vmatmul.mubr.f32.gmra.mrb[0].mxu0 %v264
        %v475 = vpop.f32.mrb[0].mxu0
        %v476 = vadd.f32 %v399, %v475
        %v477 = vpop.f32.mrb[0].mxu0
        %v478 = vadd.f32 %v401, %v477
        %479 = vmatprep.mubr.f32.mxu0 0.0
        %480 = vmatmul.mubr.f32.gmra.mrb[0].mxu0 %v265
        %v481 = vpop.f32.mrb[0].mxu0
        %v482 = vadd.f32 %v405, %v481
        %v483 = vpop.f32.mrb[0].mxu0
        %v484 = vadd.f32 %v407, %v483
        %485 = vdwg.mxu0
        %v486 = vld [vmem:[#allocation2 + $0x6] sm:$0xff]
        %v487 = vld [vmem:[#allocation2 + $0xe] sm:$0xff]
        %v488 = vld [vmem:[#allocation4 + $0x200] sm:$0xff]
        %v489 = vld [vmem:[#allocation4 + $0x208] sm:$0xff]
        %v490 = vld [vmem:[#allocation4 + $0x210] sm:$0xff]
        %v491 = vld [vmem:[#allocation4 + $0x218] sm:$0xff]
        %v492 = vld [vmem:[#allocation4 + $0x220] sm:$0xff]
        %v493 = vld [vmem:[#allocation4 + $0x228] sm:$0xff]
        %v494 = vld [vmem:[#allocation4 + $0x230] sm:$0xff]
        %v495 = vld [vmem:[#allocation4 + $0x238] sm:$0xff]
        %v496 = vld [vmem:[#allocation4 + $0x240] sm:$0xff]
        %v497 = vld [vmem:[#allocation4 + $0x248] sm:$0xff]
        %v498 = vld [vmem:[#allocation4 + $0x250] sm:$0xff]
        %v499 = vld [vmem:[#allocation4 + $0x258] sm:$0xff]
        %v500 = vld [vmem:[#allocation4 + $0x260] sm:$0xff]
        %v501 = vld [vmem:[#allocation4 + $0x268] sm:$0xff]
        %v502 = vld [vmem:[#allocation4 + $0x270] sm:$0xff]
        %v503 = vld [vmem:[#allocation4 + $0x278] sm:$0xff]
        %v504 = vld [vmem:[#allocation4 + $0x280] sm:$0xff]
        %v505 = vld [vmem:[#allocation4 + $0x288] sm:$0xff]
        %v506 = vld [vmem:[#allocation4 + $0x290] sm:$0xff]
        %v507 = vld [vmem:[#allocation4 + $0x298] sm:$0xff]
        %v508 = vld [vmem:[#allocation4 + $0x2a0] sm:$0xff]
        %v509 = vld [vmem:[#allocation4 + $0x2a8] sm:$0xff]
        %v510 = vld [vmem:[#allocation4 + $0x2b0] sm:$0xff]
        %v511 = vld [vmem:[#allocation4 + $0x2b8] sm:$0xff]
        %v512 = vld [vmem:[#allocation4 + $0x2c0] sm:$0xff]
        %v513 = vld [vmem:[#allocation4 + $0x2c8] sm:$0xff]
        %v514 = vld [vmem:[#allocation4 + $0x2d0] sm:$0xff]
        %v515 = vld [vmem:[#allocation4 + $0x2d8] sm:$0xff]
        %v516 = vld [vmem:[#allocation4 + $0x2e0] sm:$0xff]
        %v517 = vld [vmem:[#allocation4 + $0x2e8] sm:$0xff]
        %v518 = vld [vmem:[#allocation4 + $0x2f0] sm:$0xff]
        %v519 = vld [vmem:[#allocation4 + $0x2f8] sm:$0xff]
        %520 = vmatprep.subr.mxu0 %v489
        %521 = vmatpush1.msra.mxu0 %v488
        %522 = vmatprep.subr.mxu0 %v491
        %523 = vmatpush1.msra.mxu0 %v490
        %524 = vmatprep.subr.mxu0 %v493
        %525 = vmatpush1.msra.mxu0 %v492
        %526 = vmatprep.subr.mxu0 %v495
        %527 = vmatpush1.msra.mxu0 %v494
        %528 = vmatprep.subr.mxu0 %v497
        %529 = vmatpush1.msra.mxu0 %v496
        %530 = vmatprep.subr.mxu0 %v499
        %531 = vmatpush1.msra.mxu0 %v498
        %532 = vmatprep.subr.mxu0 %v501
        %533 = vmatpush1.msra.mxu0 %v500
        %534 = vmatprep.subr.mxu0 %v503
        %535 = vmatpush1.msra.mxu0 %v502
        %536 = vmatprep.subr.mxu0 %v505
        %537 = vmatpush1.msra.mxu0 %v504
        %538 = vmatprep.subr.mxu0 %v507
        %539 = vmatpush1.msra.mxu0 %v506
        %540 = vmatprep.subr.mxu0 %v509
        %541 = vmatpush1.msra.mxu0 %v508
        %542 = vmatprep.subr.mxu0 %v511
        %543 = vmatpush1.msra.mxu0 %v510
        %544 = vmatprep.subr.mxu0 %v513
        %545 = vmatpush1.msra.mxu0 %v512
        %546 = vmatprep.subr.mxu0 %v515
        %547 = vmatpush1.msra.mxu0 %v514
        %548 = vmatprep.subr.mxu0 %v517
        %549 = vmatpush1.msra.mxu0 %v516
        %550 = vmatprep.subr.mxu0 %v519
        %551 = vmatpush1.msra.mxu0 %v518
        %552 = vmatprep.subr.mxu0 0.0
        %553 = vmatpush1.msra.mxu0 0.0
        %554 = vmatprep.subr.mxu0 0.0
        %555 = vmatpush1.msra.mxu0 0.0
        %556 = vmatprep.subr.mxu0 0.0
        %557 = vmatpush1.msra.mxu0 0.0
        %558 = vmatprep.subr.mxu0 0.0
        %559 = vmatpush1.msra.mxu0 0.0
        %560 = vmatprep.subr.mxu0 0.0
        %561 = vmatpush1.msra.mxu0 0.0
        %562 = vmatprep.subr.mxu0 0.0
        %563 = vmatpush1.msra.mxu0 0.0
        %564 = vmatprep.subr.mxu0 0.0
        %565 = vmatpush1.msra.mxu0 0.0
        %566 = vmatprep.subr.mxu0 0.0
        %567 = vmatpush1.msra.mxu0 0.0
        %568 = vmatprep.subr.mxu0 0.0
        %569 = vmatpush1.msra.mxu0 0.0
        %570 = vmatprep.subr.mxu0 0.0
        %571 = vmatpush1.msra.mxu0 0.0
        %572 = vmatprep.subr.mxu0 0.0
        %573 = vmatpush1.msra.mxu0 0.0
        %574 = vmatprep.subr.mxu0 0.0
        %575 = vmatpush1.msra.mxu0 0.0
        %576 = vmatprep.subr.mxu0 0.0
        %577 = vmatpush1.msra.mxu0 0.0
        %578 = vmatprep.subr.mxu0 0.0
        %579 = vmatpush1.msra.mxu0 0.0
        %580 = vmatprep.subr.mxu0 0.0
        %581 = vmatpush1.msra.mxu0 0.0
        %582 = vmatprep.subr.mxu0 0.0
        %583 = vmatpush1.msra.mxu0 0.0
        %584 = vmatprep.mubr.f32.mxu0 0.0
        %585 = vmatmul.mubr.f32.gmra.mrb[0].mxu0 %v486
        %v586 = vpop.f32.mrb[0].mxu0
        %v587 = vadd.f32 0.0, %v586
        %v588 = vpop.f32.mrb[0].mxu0
        %v589 = vadd.f32 0.0, %v588
        %590 = vmatprep.mubr.f32.mxu0 0.0
        %591 = vmatmul.mubr.f32.gmra.mrb[0].mxu0 %v487
        %v592 = vpop.f32.mrb[0].mxu0
        %v593 = vadd.f32 0.0, %v592
        %v594 = vpop.f32.mrb[0].mxu0
        %v595 = vadd.f32 0.0, %v594
        %596 = vdwg.mxu0
        %v597 = vadd.f32 %v476, %v587
        %v598 = vadd.f32 %v478, %v589
        %v599 = vadd.f32 %v482, %v593
        %v600 = vadd.f32 %v484, %v595
        %601 = vst [vmem:[%s235] sm:$0xff] %v598
        %602 = vst [vmem:[%s235 + $0x8] sm:$0xff] %v600
        %v603 = vadd.f32 %v598, %v600
        %v604 = vrot.slane %v603, 4
        %v605 = vadd.f32 %v603, %v604
        %v606 = vrot.slane %v605, 2
        %v607 = vadd.f32 %v605, %v606
        %v608 = vrot.slane %v607, 1
        %v609 = vadd.f32 %v607, %v608
        %v610 = vadd.f32 %v609, 0.0
        %v611 = vmul.f32 %v598, %v598
        %v612 = vmul.f32 %v600, %v600
        %v613 = vadd.f32 %v611, %v612
        %v614 = vrot.slane %v613, 4
        %v615 = vadd.f32 %v613, %v614
        %v616 = vrot.slane %v615, 2
        %v617 = vadd.f32 %v615, %v616
        %v618 = vrot.slane %v617, 1
        %v619 = vadd.f32 %v617, %v618
        %v620 = vadd.f32 %v619, 0.0
        %v621 = vld [vmem:[#allocation2] sm:$0xff]
        %v622 = vld [vmem:[#allocation2 + $0x8] sm:$0xff]
        %v623 = vld [vmem:[#allocation7] sm:$0xff]
        %v624 = vld [vmem:[#allocation7 + $0x8] sm:$0xff]
        %v625 = vld [vmem:[#allocation7 + $0x10] sm:$0xff]
        %v626 = vld [vmem:[#allocation7 + $0x18] sm:$0xff]
        %v627 = vld [vmem:[#allocation7 + $0x20] sm:$0xff]
        %v628 = vld [vmem:[#allocation7 + $0x28] sm:$0xff]
        %v629 = vld [vmem:[#allocation7 + $0x30] sm:$0xff]
        %v630 = vld [vmem:[#allocation7 + $0x38] sm:$0xff]
        %v631 = vld [vmem:[#allocation7 + $0x40] sm:$0xff]
        %v632 = vld [vmem:[#allocation7 + $0x48] sm:$0xff]
        %v633 = vld [vmem:[#allocation7 + $0x50] sm:$0xff]
        %v634 = vld [vmem:[#allocation7 + $0x58] sm:$0xff]
        %v635 = vld [vmem:[#allocation7 + $0x60] sm:$0xff]
        %v636 = vld [vmem:[#allocation7 + $0x68] sm:$0xff]
        %v637 = vld [vmem:[#allocation7 + $0x70] sm:$0xff]
        %v638 = vld [vmem:[#allocation7 + $0x78] sm:$0xff]
        %639 = vmatprep.subr.mxu0 0.0
        %640 = vmatpush1.msra.mxu0 %v623
        %641 = vmatprep.subr.mxu0 0.0
        %642 = vmatpush1.msra.mxu0 %v624
        %643 = vmatprep.subr.mxu0 0.0
        %644 = vmatpush1.msra.mxu0 %v625
        %645 = vmatprep.subr.mxu0 0.0
        %646 = vmatpush1.msra.mxu0 %v626
        %647 = vmatprep.subr.mxu0 0.0
        %648 = vmatpush1.msra.mxu0 %v627
        %649 = vmatprep.subr.mxu0 0.0
        %650 = vmatpush1.msra.mxu0 %v628
        %651 = vmatprep.subr.mxu0 0.0
        %652 = vmatpush1.msra.mxu0 %v629
        %653 = vmatprep.subr.mxu0 0.0
        %654 = vmatpush1.msra.mxu0 %v630
        %655 = vmatprep.subr.mxu0 0.0
        %656 = vmatpush1.msra.mxu0 %v631
        %657 = vmatprep.subr.mxu0 0.0
        %658 = vmatpush1.msra.mxu0 %v632
        %659 = vmatprep.subr.mxu0 0.0
        %660 = vmatpush1.msra.mxu0 %v633
        %661 = vmatprep.subr.mxu0 0.0
        %662 = vmatpush1.msra.mxu0 %v634
        %663 = vmatprep.subr.mxu0 0.0
        %664 = vmatpush1.msra.mxu0 %v635
        %665 = vmatprep.subr.mxu0 0.0
        %666 = vmatpush1.msra.mxu0 %v636
        %667 = vmatprep.subr.mxu0 0.0
        %668 = vmatpush1.msra.mxu0 %v637
        %669 = vmatprep.subr.mxu0 0.0
        %670 = vmatpush1.msra.mxu0 %v638
        %671 = vmatprep.subr.mxu0 0.0
        %672 = vmatpush1.msra.mxu0 0.0
        %673 = vmatprep.subr.mxu0 0.0
        %674 = vmatpush1.msra.mxu0 0.0
        %675 = vmatprep.subr.mxu0 0.0
        %676 = vmatpush1.msra.mxu0 0.0
        %677 = vmatprep.subr.mxu0 0.0
        %678 = vmatpush1.msra.mxu0 0.0
        %679 = vmatprep.subr.mxu0 0.0
        %680 = vmatpush1.msra.mxu0 0.0
        %681 = vmatprep.subr.mxu0 0.0
        %682 = vmatpush1.msra.mxu0 0.0
        %683 = vmatprep.subr.mxu0 0.0
        %684 = vmatpush1.msra.mxu0 0.0
        %685 = vmatprep.subr.mxu0 0.0
        %686 = vmatpush1.msra.mxu0 0.0
        %687 = vmatprep.subr.mxu0 0.0
        %688 = vmatpush1.msra.mxu0 0.0
        %689 = vmatprep.subr.mxu0 0.0
        %690 = vmatpush1.msra.mxu0 0.0
        %691 = vmatprep.subr.mxu0 0.0
        %692 = vmatpush1.msra.mxu0 0.0
        %693 = vmatprep.subr.mxu0 0.0
        %694 = vmatpush1.msra.mxu0 0.0
        %695 = vmatprep.subr.mxu0 0.0
        %696 = vmatpush1.msra.mxu0 0.0
        %697 = vmatprep.subr.mxu0 0.0
        %698 = vmatpush1.msra.mxu0 0.0
        %699 = vmatprep.subr.mxu0 0.0
        %700 = vmatpush1.msra.mxu0 0.0
        %701 = vmatprep.subr.mxu0 0.0
        %702 = vmatpush1.msra.mxu0 0.0
        %703 = vmatprep.mubr.f32.mxu0 0.0
        %704 = vmatmul.mubr.f32.gmra.mrb[0].mxu0 %v621
        %v705 = vpop.f32.mrb[0].mxu0
        %v706 = vadd.f32 0.0, %v705
        %v707 = vpop.f32.mrb[0].mxu0
        %708 = vmatprep.mubr.f32.mxu0 0.0
        %709 = vmatmul.mubr.f32.gmra.mrb[0].mxu0 %v622
        %v710 = vpop.f32.mrb[0].mxu0
        %v711 = vadd.f32 0.0, %v710
        %v712 = vpop.f32.mrb[0].mxu0
        %713 = vdwg.mxu0
        %v714 = vadd.f32 %v597, %v706
        %v715 = vadd.f32 %v599, %v711
        %v716 = vld [vmem:[#allocation2 + $0x1] sm:$0xff]
        %v717 = vld [vmem:[#allocation2 + $0x9] sm:$0xff]
        %v718 = vld [vmem:[#allocation7 + $0x80] sm:$0xff]
        %v719 = vld [vmem:[#allocation7 + $0x88] sm:$0xff]
        %v720 = vld [vmem:[#allocation7 + $0x90] sm:$0xff]
        %v721 = vld [vmem:[#allocation7 + $0x98] sm:$0xff]
        %v722 = vld [vmem:[#allocation7 + $0xa0] sm:$0xff]
        %v723 = vld [vmem:[#allocation7 + $0xa8] sm:$0xff]
        %v724 = vld [vmem:[#allocation7 + $0xb0] sm:$0xff]
        %v725 = vld [vmem:[#allocation7 + $0xb8] sm:$0xff]
        %v726 = vld [vmem:[#allocation7 + $0xc0] sm:$0xff]
        %v727 = vld [vmem:[#allocation7 + $0xc8] sm:$0xff]
        %v728 = vld [vmem:[#allocation7 + $0xd0] sm:$0xff]
        %v729 = vld [vmem:[#allocation7 + $0xd8] sm:$0xff]
        %v730 = vld [vmem:[#allocation7 + $0xe0] sm:$0xff]
        %v731 = vld [vmem:[#allocation7 + $0xe8] sm:$0xff]
        %v732 = vld [vmem:[#allocation7 + $0xf0] sm:$0xff]
        %v733 = vld [vmem:[#allocation7 + $0xf8] sm:$0xff]
        %734 = vmatprep.subr.mxu0 0.0
        %735 = vmatpush1.msra.mxu0 %v718
        %736 = vmatprep.subr.mxu0 0.0
        %737 = vmatpush1.msra.mxu0 %v719
        %738 = vmatprep.subr.mxu0 0.0
        %739 = vmatpush1.msra.mxu0 %v720
        %740 = vmatprep.subr.mxu0 0.0
        %741 = vmatpush1.msra.mxu0 %v721
        %742 = vmatprep.subr.mxu0 0.0
        %743 = vmatpush1.msra.mxu0 %v722
        %744 = vmatprep.subr.mxu0 0.0
        %745 = vmatpush1.msra.mxu0 %v723
        %746 = vmatprep.subr.mxu0 0.0
        %747 = vmatpush1.msra.mxu0 %v724
        %748 = vmatprep.subr.mxu0 0.0
        %749 = vmatpush1.msra.mxu0 %v725
        %750 = vmatprep.subr.mxu0 0.0
        %751 = vmatpush1.msra.mxu0 %v726
        %752 = vmatprep.subr.mxu0 0.0
        %753 = vmatpush1.msra.mxu0 %v727
        %754 = vmatprep.subr.mxu0 0.0
        %755 = vmatpush1.msra.mxu0 %v728
        %756 = vmatprep.subr.mxu0 0.0
        %757 = vmatpush1.msra.mxu0 %v729
        %758 = vmatprep.subr.mxu0 0.0
        %759 = vmatpush1.msra.mxu0 %v730
        %760 = vmatprep.subr.mxu0 0.0
        %761 = vmatpush1.msra.mxu0 %v731
        %762 = vmatprep.subr.mxu0 0.0
        %763 = vmatpush1.msra.mxu0 %v732
        %764 = vmatprep.subr.mxu0 0.0
        %765 = vmatpush1.msra.mxu0 %v733
        %766 = vmatprep.subr.mxu0 0.0
        %767 = vmatpush1.msra.mxu0 0.0
        %768 = vmatprep.subr.mxu0 0.0
        %769 = vmatpush1.msra.mxu0 0.0
        %770 = vmatprep.subr.mxu0 0.0
        %771 = vmatpush1.msra.mxu0 0.0
        %772 = vmatprep.subr.mxu0 0.0
        %773 = vmatpush1.msra.mxu0 0.0
        %774 = vmatprep.subr.mxu0 0.0
        %775 = vmatpush1.msra.mxu0 0.0
        %776 = vmatprep.subr.mxu0 0.0
        %777 = vmatpush1.msra.mxu0 0.0
        %778 = vmatprep.subr.mxu0 0.0
        %779 = vmatpush1.msra.mxu0 0.0
        %780 = vmatprep.subr.mxu0 0.0
        %781 = vmatpush1.msra.mxu0 0.0
        %782 = vmatprep.subr.mxu0 0.0
        %783 = vmatpush1.msra.mxu0 0.0
        %784 = vmatprep.subr.mxu0 0.0
        %785 = vmatpush1.msra.mxu0 0.0
        %786 = vmatprep.subr.mxu0 0.0
        %787 = vmatpush1.msra.mxu0 0.0
        %788 = vmatprep.subr.mxu0 0.0
        %789 = vmatpush1.msra.mxu0 0.0
        %790 = vmatprep.subr.mxu0 0.0
        %791 = vmatpush1.msra.mxu0 0.0
        %792 = vmatprep.subr.mxu0 0.0
        %793 = vmatpush1.msra.mxu0 0.0
        %794 = vmatprep.subr.mxu0 0.0
        %795 = vmatpush1.msra.mxu0 0.0
        %796 = vmatprep.subr.mxu0 0.0
        %797 = vmatpush1.msra.mxu0 0.0
        %798 = vmatprep.mubr.f32.mxu0 0.0
        %799 = vmatmul.mubr.f32.gmra.mrb[0].mxu0 %v716
        %v800 = vpop.f32.mrb[0].mxu0
        %v801 = vadd.f32 0.0, %v800
        %v802 = vpop.f32.mrb[0].mxu0
        %803 = vmatprep.mubr.f32.mxu0 0.0
        %804 = vmatmul.mubr.f32.gmra.mrb[0].mxu0 %v717
        %v805 = vpop.f32.mrb[0].mxu0
        %v806 = vadd.f32 0.0, %v805
        %v807 = vpop.f32.mrb[0].mxu0
        %808 = vdwg.mxu0
        %v809 = vadd.f32 %v714, %v801
        %v810 = vadd.f32 %v715, %v806
        %v811 = vld [vmem:[#allocation2 + $0x2] sm:$0xff]
        %v812 = vld [vmem:[#allocation2 + $0xa] sm:$0xff]
        %v813 = vld [vmem:[#allocation7 + $0x100] sm:$0xff]
        %v814 = vld [vmem:[#allocation7 + $0x108] sm:$0xff]
        %v815 = vld [vmem:[#allocation7 + $0x110] sm:$0xff]
        %v816 = vld [vmem:[#allocation7 + $0x118] sm:$0xff]
        %v817 = vld [vmem:[#allocation7 + $0x120] sm:$0xff]
        %v818 = vld [vmem:[#allocation7 + $0x128] sm:$0xff]
        %v819 = vld [vmem:[#allocation7 + $0x130] sm:$0xff]
        %v820 = vld [vmem:[#allocation7 + $0x138] sm:$0xff]
        %v821 = vld [vmem:[#allocation7 + $0x140] sm:$0xff]
        %v822 = vld [vmem:[#allocation7 + $0x148] sm:$0xff]
        %v823 = vld [vmem:[#allocation7 + $0x150] sm:$0xff]
        %v824 = vld [vmem:[#allocation7 + $0x158] sm:$0xff]
        %v825 = vld [vmem:[#allocation7 + $0x160] sm:$0xff]
        %v826 = vld [vmem:[#allocation7 + $0x168] sm:$0xff]
        %v827 = vld [vmem:[#allocation7 + $0x170] sm:$0xff]
        %v828 = vld [vmem:[#allocation7 + $0x178] sm:$0xff]
        %829 = vmatprep.subr.mxu0 0.0
        %830 = vmatpush1.msra.mxu0 %v813
        %831 = vmatprep.subr.mxu0 0.0
        %832 = vmatpush1.msra.mxu0 %v814
        %833 = vmatprep.subr.mxu0 0.0
        %834 = vmatpush1.msra.mxu0 %v815
        %835 = vmatprep.subr.mxu0 0.0
        %836 = vmatpush1.msra.mxu0 %v816
        %837 = vmatprep.subr.mxu0 0.0
        %838 = vmatpush1.msra.mxu0 %v817
        %839 = vmatprep.subr.mxu0 0.0
        %840 = vmatpush1.msra.mxu0 %v818
        %841 = vmatprep.subr.mxu0 0.0
        %842 = vmatpush1.msra.mxu0 %v819
        %843 = vmatprep.subr.mxu0 0.0
        %844 = vmatpush1.msra.mxu0 %v820
        %845 = vmatprep.subr.mxu0 0.0
        %846 = vmatpush1.msra.mxu0 %v821
        %847 = vmatprep.subr.mxu0 0.0
        %848 = vmatpush1.msra.mxu0 %v822
        %849 = vmatprep.subr.mxu0 0.0
        %850 = vmatpush1.msra.mxu0 %v823
        %851 = vmatprep.subr.mxu0 0.0
        %852 = vmatpush1.msra.mxu0 %v824
        %853 = vmatprep.subr.mxu0 0.0
        %854 = vmatpush1.msra.mxu0 %v825
        %855 = vmatprep.subr.mxu0 0.0
        %856 = vmatpush1.msra.mxu0 %v826
        %857 = vmatprep.subr.mxu0 0.0
        %858 = vmatpush1.msra.mxu0 %v827
        %859 = vmatprep.subr.mxu0 0.0
        %860 = vmatpush1.msra.mxu0 %v828
        %861 = vmatprep.subr.mxu0 0.0
        %862 = vmatpush1.msra.mxu0 0.0
        %863 = vmatprep.subr.mxu0 0.0
        %864 = vmatpush1.msra.mxu0 0.0
        %865 = vmatprep.subr.mxu0 0.0
        %866 = vmatpush1.msra.mxu0 0.0
        %867 = vmatprep.subr.mxu0 0.0
        %868 = vmatpush1.msra.mxu0 0.0
        %869 = vmatprep.subr.mxu0 0.0
        %870 = vmatpush1.msra.mxu0 0.0
        %871 = vmatprep.subr.mxu0 0.0
        %872 = vmatpush1.msra.mxu0 0.0
        %873 = vmatprep.subr.mxu0 0.0
        %874 = vmatpush1.msra.mxu0 0.0
        %875 = vmatprep.subr.mxu0 0.0
        %876 = vmatpush1.msra.mxu0 0.0
        %877 = vmatprep.subr.mxu0 0.0
        %878 = vmatpush1.msra.mxu0 0.0
        %879 = vmatprep.subr.mxu0 0.0
        %880 = vmatpush1.msra.mxu0 0.0
        %881 = vmatprep.subr.mxu0 0.0
        %882 = vmatpush1.msra.mxu0 0.0
        %883 = vmatprep.subr.mxu0 0.0
        %884 = vmatpush1.msra.mxu0 0.0
        %885 = vmatprep.subr.mxu0 0.0
        %886 = vmatpush1.msra.mxu0 0.0
        %887 = vmatprep.subr.mxu0 0.0
        %888 = vmatpush1.msra.mxu0 0.0
        %889 = vmatprep.subr.mxu0 0.0
        %890 = vmatpush1.msra.mxu0 0.0
        %891 = vmatprep.subr.mxu0 0.0
        %892 = vmatpush1.msra.mxu0 0.0
        %893 = vmatprep.mubr.f32.mxu0 0.0
        %894 = vmatmul.mubr.f32.gmra.mrb[0].mxu0 %v811
        %v895 = vpop.f32.mrb[0].mxu0
        %v896 = vadd.f32 0.0, %v895
        %v897 = vpop.f32.mrb[0].mxu0
        %898 = vmatprep.mubr.f32.mxu0 0.0
        %899 = vmatmul.mubr.f32.gmra.mrb[0].mxu0 %v812
        %v900 = vpop.f32.mrb[0].mxu0
        %v901 = vadd.f32 0.0, %v900
        %v902 = vpop.f32.mrb[0].mxu0
        %903 = vdwg.mxu0
        %v904 = vadd.f32 %v809, %v896
        %v905 = vadd.f32 %v810, %v901
        %v906 = vld [vmem:[#allocation2 + $0x3] sm:$0xff]
        %v907 = vld [vmem:[#allocation2 + $0xb] sm:$0xff]
        %v908 = vld [vmem:[#allocation7 + $0x180] sm:$0xff]
        %v909 = vld [vmem:[#allocation7 + $0x188] sm:$0xff]
        %v910 = vld [vmem:[#allocation7 + $0x190] sm:$0xff]
        %v911 = vld [vmem:[#allocation7 + $0x198] sm:$0xff]
        %v912 = vld [vmem:[#allocation7 + $0x1a0] sm:$0xff]
        %v913 = vld [vmem:[#allocation7 + $0x1a8] sm:$0xff]
        %v914 = vld [vmem:[#allocation7 + $0x1b0] sm:$0xff]
        %v915 = vld [vmem:[#allocation7 + $0x1b8] sm:$0xff]
        %v916 = vld [vmem:[#allocation7 + $0x1c0] sm:$0xff]
        %v917 = vld [vmem:[#allocation7 + $0x1c8] sm:$0xff]
        %v918 = vld [vmem:[#allocation7 + $0x1d0] sm:$0xff]
        %v919 = vld [vmem:[#allocation7 + $0x1d8] sm:$0xff]
        %v920 = vld [vmem:[#allocation7 + $0x1e0] sm:$0xff]
        %v921 = vld [vmem:[#allocation7 + $0x1e8] sm:$0xff]
        %v922 = vld [vmem:[#allocation7 + $0x1f0] sm:$0xff]
        %v923 = vld [vmem:[#allocation7 + $0x1f8] sm:$0xff]
        %924 = vmatprep.subr.mxu0 0.0
        %925 = vmatpush1.msra.mxu0 %v908
        %926 = vmatprep.subr.mxu0 0.0
        %927 = vmatpush1.msra.mxu0 %v909
        %928 = vmatprep.subr.mxu0 0.0
        %929 = vmatpush1.msra.mxu0 %v910
        %930 = vmatprep.subr.mxu0 0.0
        %931 = vmatpush1.msra.mxu0 %v911
        %932 = vmatprep.subr.mxu0 0.0
        %933 = vmatpush1.msra.mxu0 %v912
        %934 = vmatprep.subr.mxu0 0.0
        %935 = vmatpush1.msra.mxu0 %v913
        %936 = vmatprep.subr.mxu0 0.0
        %937 = vmatpush1.msra.mxu0 %v914
        %938 = vmatprep.subr.mxu0 0.0
        %939 = vmatpush1.msra.mxu0 %v915
        %940 = vmatprep.subr.mxu0 0.0
        %941 = vmatpush1.msra.mxu0 %v916
        %942 = vmatprep.subr.mxu0 0.0
        %943 = vmatpush1.msra.mxu0 %v917
        %944 = vmatprep.subr.mxu0 0.0
        %945 = vmatpush1.msra.mxu0 %v918
        %946 = vmatprep.subr.mxu0 0.0
        %947 = vmatpush1.msra.mxu0 %v919
        %948 = vmatprep.subr.mxu0 0.0
        %949 = vmatpush1.msra.mxu0 %v920
        %950 = vmatprep.subr.mxu0 0.0
        %951 = vmatpush1.msra.mxu0 %v921
        %952 = vmatprep.subr.mxu0 0.0
        %953 = vmatpush1.msra.mxu0 %v922
        %954 = vmatprep.subr.mxu0 0.0
        %955 = vmatpush1.msra.mxu0 %v923
        %956 = vmatprep.subr.mxu0 0.0
        %957 = vmatpush1.msra.mxu0 0.0
        %958 = vmatprep.subr.mxu0 0.0
        %959 = vmatpush1.msra.mxu0 0.0
        %960 = vmatprep.subr.mxu0 0.0
        %961 = vmatpush1.msra.mxu0 0.0
        %962 = vmatprep.subr.mxu0 0.0
        %963 = vmatpush1.msra.mxu0 0.0
        %964 = vmatprep.subr.mxu0 0.0
        %965 = vmatpush1.msra.mxu0 0.0
        %966 = vmatprep.subr.mxu0 0.0
        %967 = vmatpush1.msra.mxu0 0.0
        %968 = vmatprep.subr.mxu0 0.0
        %969 = vmatpush1.msra.mxu0 0.0
        %970 = vmatprep.subr.mxu0 0.0
        %971 = vmatpush1.msra.mxu0 0.0
        %972 = vmatprep.subr.mxu0 0.0
        %973 = vmatpush1.msra.mxu0 0.0
        %974 = vmatprep.subr.mxu0 0.0
        %975 = vmatpush1.msra.mxu0 0.0
        %976 = vmatprep.subr.mxu0 0.0
        %977 = vmatpush1.msra.mxu0 0.0
        %978 = vmatprep.subr.mxu0 0.0
        %979 = vmatpush1.msra.mxu0 0.0
        %980 = vmatprep.subr.mxu0 0.0
        %981 = vmatpush1.msra.mxu0 0.0
        %982 = vmatprep.subr.mxu0 0.0
        %983 = vmatpush1.msra.mxu0 0.0
        %984 = vmatprep.subr.mxu0 0.0
        %985 = vmatpush1.msra.mxu0 0.0
        %986 = vmatprep.subr.mxu0 0.0
        %987 = vmatpush1.msra.mxu0 0.0
        %988 = vmatprep.mubr.f32.mxu0 0.0
        %989 = vmatmul.mubr.f32.gmra.mrb[0].mxu0 %v906
        %v990 = vpop.f32.mrb[0].mxu0
        %v991 = vadd.f32 0.0, %v990
        %v992 = vpop.f32.mrb[0].mxu0
        %993 = vmatprep.mubr.f32.mxu0 0.0
        %994 = vmatmul.mubr.f32.gmra.mrb[0].mxu0 %v907
        %v995 = vpop.f32.mrb[0].mxu0
        %v996 = vadd.f32 0.0, %v995
        %v997 = vpop.f32.mrb[0].mxu0
        %998 = vdwg.mxu0
        %v999 = vadd.f32 %v904, %v991
        %v1000 = vadd.f32 %v905, %v996
        %v1001 = vld [vmem:[#allocation2 + $0x7] sm:$0xff]
        %v1002 = vld [vmem:[#allocation2 + $0xf] sm:$0xff]
        %v1003 = vld [vmem:[#allocation7 + $0x200] sm:$0xff]
        %v1004 = vld [vmem:[#allocation7 + $0x208] sm:$0xff]
        %v1005 = vld [vmem:[#allocation7 + $0x210] sm:$0xff]
        %v1006 = vld [vmem:[#allocation7 + $0x218] sm:$0xff]
        %v1007 = vld [vmem:[#allocation7 + $0x220] sm:$0xff]
        %v1008 = vld [vmem:[#allocation7 + $0x228] sm:$0xff]
        %v1009 = vld [vmem:[#allocation7 + $0x230] sm:$0xff]
        %v1010 = vld [vmem:[#allocation7 + $0x238] sm:$0xff]
        %v1011 = vld [vmem:[#allocation7 + $0x240] sm:$0xff]
        %v1012 = vld [vmem:[#allocation7 + $0x248] sm:$0xff]
        %v1013 = vld [vmem:[#allocation7 + $0x250] sm:$0xff]
        %v1014 = vld [vmem:[#allocation7 + $0x258] sm:$0xff]
        %v1015 = vld [vmem:[#allocation7 + $0x260] sm:$0xff]
        %v1016 = vld [vmem:[#allocation7 + $0x268] sm:$0xff]
        %v1017 = vld [vmem:[#allocation7 + $0x270] sm:$0xff]
        %v1018 = vld [vmem:[#allocation7 + $0x278] sm:$0xff]
        %1019 = vmatprep.subr.mxu0 0.0
        %1020 = vmatpush1.msra.mxu0 %v1003
        %1021 = vmatprep.subr.mxu0 0.0
        %1022 = vmatpush1.msra.mxu0 %v1004
        %1023 = vmatprep.subr.mxu0 0.0
        %1024 = vmatpush1.msra.mxu0 %v1005
        %1025 = vmatprep.subr.mxu0 0.0
        %1026 = vmatpush1.msra.mxu0 %v1006
        %1027 = vmatprep.subr.mxu0 0.0
        %1028 = vmatpush1.msra.mxu0 %v1007
        %1029 = vmatprep.subr.mxu0 0.0
        %1030 = vmatpush1.msra.mxu0 %v1008
        %1031 = vmatprep.subr.mxu0 0.0
        %1032 = vmatpush1.msra.mxu0 %v1009
        %1033 = vmatprep.subr.mxu0 0.0
        %1034 = vmatpush1.msra.mxu0 %v1010
        %1035 = vmatprep.subr.mxu0 0.0
        %1036 = vmatpush1.msra.mxu0 %v1011
        %1037 = vmatprep.subr.mxu0 0.0
        %1038 = vmatpush1.msra.mxu0 %v1012
        %1039 = vmatprep.subr.mxu0 0.0
        %1040 = vmatpush1.msra.mxu0 %v1013
        %1041 = vmatprep.subr.mxu0 0.0
        %1042 = vmatpush1.msra.mxu0 %v1014
        %1043 = vmatprep.subr.mxu0 0.0
        %1044 = vmatpush1.msra.mxu0 %v1015
        %1045 = vmatprep.subr.mxu0 0.0
        %1046 = vmatpush1.msra.mxu0 %v1016
        %1047 = vmatprep.subr.mxu0 0.0
        %1048 = vmatpush1.msra.mxu0 %v1017
        %1049 = vmatprep.subr.mxu0 0.0
        %1050 = vmatpush1.msra.mxu0 %v1018
        %1051 = vmatprep.subr.mxu0 0.0
        %1052 = vmatpush1.msra.mxu0 0.0
        %1053 = vmatprep.subr.mxu0 0.0
        %1054 = vmatpush1.msra.mxu0 0.0
        %1055 = vmatprep.subr.mxu0 0.0
        %1056 = vmatpush1.msra.mxu0 0.0
        %1057 = vmatprep.subr.mxu0 0.0
        %1058 = vmatpush1.msra.mxu0 0.0
        %1059 = vmatprep.subr.mxu0 0.0
        %1060 = vmatpush1.msra.mxu0 0.0
        %1061 = vmatprep.subr.mxu0 0.0
        %1062 = vmatpush1.msra.mxu0 0.0
        %1063 = vmatprep.subr.mxu0 0.0
        %1064 = vmatpush1.msra.mxu0 0.0
        %1065 = vmatprep.subr.mxu0 0.0
        %1066 = vmatpush1.msra.mxu0 0.0
        %1067 = vmatprep.subr.mxu0 0.0
        %1068 = vmatpush1.msra.mxu0 0.0
        %1069 = vmatprep.subr.mxu0 0.0
        %1070 = vmatpush1.msra.mxu0 0.0
        %1071 = vmatprep.subr.mxu0 0.0
        %1072 = vmatpush1.msra.mxu0 0.0
        %1073 = vmatprep.subr.mxu0 0.0
        %1074 = vmatpush1.msra.mxu0 0.0
        %1075 = vmatprep.subr.mxu0 0.0
        %1076 = vmatpush1.msra.mxu0 0.0
        %1077 = vmatprep.subr.mxu0 0.0
        %1078 = vmatpush1.msra.mxu0 0.0
        %1079 = vmatprep.subr.mxu0 0.0
        %1080 = vmatpush1.msra.mxu0 0.0
        %1081 = vmatprep.subr.mxu0 0.0
        %1082 = vmatpush1.msra.mxu0 0.0
        %1083 = vmatprep.mubr.f32.mxu0 0.0
        %1084 = vmatmul.mubr.f32.gmra.mrb[0].mxu0 %v1001
        %v1085 = vpop.f32.mrb[0].mxu0
        %v1086 = vadd.f32 0.0, %v1085
        %v1087 = vpop.f32.mrb[0].mxu0
        %1088 = vmatprep.mubr.f32.mxu0 0.0
        %1089 = vmatmul.mubr.f32.gmra.mrb[0].mxu0 %v1002
        %v1090 = vpop.f32.mrb[0].mxu0
        %v1091 = vadd.f32 0.0, %v1090
        %v1092 = vpop.f32.mrb[0].mxu0
        %1093 = vdwg.mxu0
        %v1094 = vadd.f32 %v999, %v1086
        %v1095 = vadd.f32 %v1000, %v1091
        %v1096 = vld [vmem:[#allocation2 + $0x8] sm:$0xff]
        %v1097 = vld [vmem:[#allocation2 + $0x10] sm:$0xff]
        %v1098 = vld [vmem:[#allocation7 + $0x280] sm:$0xff]
        %v1099 = vld [vmem:[#allocation7 + $0x288] sm:$0xff]
        %v1100 = vld [vmem:[#allocation7 + $0x290] sm:$0xff]
        %v1101 = vld [vmem:[#allocation7 + $0x298] sm:$0xff]
        %v1102 = vld [vmem:[#allocation7 + $0x2a0] sm:$0xff]
        %v1103 = vld [vmem:[#allocation7 + $0x2a8] sm:$0xff]
        %v1104 = vld [vmem:[#allocation7 + $0x2b0] sm:$0xff]
        %v1105 = vld [vmem:[#allocation7 + $0x2b8] sm:$0xff]
        %v1106 = vld [vmem:[#allocation7 + $0x2c0] sm:$0xff]
        %v1107 = vld [vmem:[#allocation7 + $0x2c8] sm:$0xff]
        %v1108 = vld [vmem:[#allocation7 + $0x2d0] sm:$0xff]
        %v1109 = vld [vmem:[#allocation7 + $0x2d8] sm:$0xff]
        %v1110 = vld [vmem:[#allocation7 + $0x2e0] sm:$0xff]
        %v1111 = vld [vmem:[#allocation7 + $0x2e8] sm:$0xff]
        %v1112 = vld [vmem:[#allocation7 + $0x2f0] sm:$0xff]
        %v1113 = vld [vmem:[#allocation7 + $0x2f8] sm:$0xff]
        %1114 = vmatprep.subr.mxu0 0.0
        %1115 = vmatpush1.msra.mxu0 %v1098
        %1116 = vmatprep.subr.mxu0 0.0
        %1117 = vmatpush1.msra.mxu0 %v1099
        %1118 = vmatprep.subr.mxu0 0.0
        %1119 = vmatpush1.msra.mxu0 %v1100
        %1120 = vmatprep.subr.mxu0 0.0
        %1121 = vmatpush1.msra.mxu0 %v1101
        %1122 = vmatprep.subr.mxu0 0.0
        %1123 = vmatpush1.msra.mxu0 %v1102
        %1124 = vmatprep.subr.mxu0 0.0
        %1125 = vmatpush1.msra.mxu0 %v1103
        %1126 = vmatprep.subr.mxu0 0.0
        %1127 = vmatpush1.msra.mxu0 %v1104
        %1128 = vmatprep.subr.mxu0 0.0
        %1129 = vmatpush1.msra.mxu0 %v1105
        %1130 = vmatprep.subr.mxu0 0.0
        %1131 = vmatpush1.msra.mxu0 %v1106
        %1132 = vmatprep.subr.mxu0 0.0
        %1133 = vmatpush1.msra.mxu0 %v1107
        %1134 = vmatprep.subr.mxu0 0.0
        %1135 = vmatpush1.msra.mxu0 %v1108
        %1136 = vmatprep.subr.mxu0 0.0
        %1137 = vmatpush1.msra.mxu0 %v1109
        %1138 = vmatprep.subr.mxu0 0.0
        %1139 = vmatpush1.msra.mxu0 %v1110
        %1140 = vmatprep.subr.mxu0 0.0
        %1141 = vmatpush1.msra.mxu0 %v1111
        %1142 = vmatprep.subr.mxu0 0.0
        %1143 = vmatpush1.msra.mxu0 %v1112
        %1144 = vmatprep.subr.mxu0 0.0
        %1145 = vmatpush1.msra.mxu0 %v1113
        %1146 = vmatprep.subr.mxu0 0.0
        %1147 = vmatpush1.msra.mxu0 0.0
        %1148 = vmatprep.subr.mxu0 0.0
        %1149 = vmatpush1.msra.mxu0 0.0
        %1150 = vmatprep.subr.mxu0 0.0
        %1151 = vmatpush1.msra.mxu0 0.0
        %1152 = vmatprep.subr.mxu0 0.0
        %1153 = vmatpush1.msra.mxu0 0.0
        %1154 = vmatprep.subr.mxu0 0.0
        %1155 = vmatpush1.msra.mxu0 0.0
        %1156 = vmatprep.subr.mxu0 0.0
        %1157 = vmatpush1.msra.mxu0 0.0
        %1158 = vmatprep.subr.mxu0 0.0
        %1159 = vmatpush1.msra.mxu0 0.0
        %1160 = vmatprep.subr.mxu0 0.0
        %1161 = vmatpush1.msra.mxu0 0.0
        %1162 = vmatprep.subr.mxu0 0.0
        %1163 = vmatpush1.msra.mxu0 0.0
        %1164 = vmatprep.subr.mxu0 0.0
        %1165 = vmatpush1.msra.mxu0 0.0
        %1166 = vmatprep.subr.mxu0 0.0
        %1167 = vmatpush1.msra.mxu0 0.0
        %1168 = vmatprep.subr.mxu0 0.0
        %1169 = vmatpush1.msra.mxu0 0.0
        %1170 = vmatprep.subr.mxu0 0.0
        %1171 = vmatpush1.msra.mxu0 0.0
        %1172 = vmatprep.subr.mxu0 0.0
        %1173 = vmatpush1.msra.mxu0 0.0
        %1174 = vmatprep.subr.mxu0 0.0
        %1175 = vmatpush1.msra.mxu0 0.0
        %1176 = vmatprep.subr.mxu0 0.0
        %1177 = vmatpush1.msra.mxu0 0.0
        %1178 = vmatprep.mubr.f32.mxu0 0.0
        %1179 = vmatmul.mubr.f32.gmra.mrb[0].mxu0 %v1096
        %v1180 = vpop.f32.mrb[0].mxu0
        %v1181 = vadd.f32 0.0, %v1180
        %v1182 = vpop.f32.mrb[0].mxu0
        %1183 = vmatprep.mubr.f32.mxu0 0.0
        %1184 = vmatmul.mubr.f32.gmra.mrb[0].mxu0 %v1097
        %v1185 = vpop.f32.mrb[0].mxu0
        %v1186 = vadd.f32 0.0, %v1185
        %v1187 = vpop.f32.mrb[0].mxu0
        %1188 = vdwg.mxu0
        %v1189 = vadd.f32 %v1094, %v1181
        %v1190 = vadd.f32 %v1095, %v1186
        %v1191 = vld [vmem:[#allocation2 + $0x9] sm:$0xff]
        %v1192 = vld [vmem:[#allocation2 + $0x11] sm:$0xff]
        %v1193 = vld [vmem:[#allocation7 + $0x300] sm:$0xff]
        %v1194 = vld [vmem:[#allocation7 + $0x308] sm:$0xff]
        %v1195 = vld [vmem:[#allocation7 + $0x310] sm:$0xff]
        %v1196 = vld [vmem:[#allocation7 + $0x318] sm:$0xff]
        %v1197 = vld [vmem:[#allocation7 + $0x320] sm:$0xff]
        %v1198 = vld [vmem:[#allocation7 + $0x328] sm:$0xff]
        %v1199 = vld [vmem:[#allocation7 + $0x330] sm:$0xff]
        %v1200 = vld [vmem:[#allocation7 + $0x338] sm:$0xff]
        %v1201 = vld [vmem:[#allocation7 + $0x340] sm:$0xff]
        %v1202 = vld [vmem:[#allocation7 + $0x348] sm:$0xff]
        %v1203 = vld [vmem:[#allocation7 + $0x350] sm:$0xff]
        %v1204 = vld [vmem:[#allocation7 + $0x358] sm:$0xff]
        %v1205 = vld [vmem:[#allocation7 + $0x360] sm:$0xff]
        %v1206 = vld [vmem:[#allocation7 + $0x368] sm:$0xff]
        %v1207 = vld [vmem:[#allocation7 + $0x370] sm:$0xff]
        %v1208 = vld [vmem:[#allocation7 + $0x378] sm:$0xff]
        %1209 = vmatprep.subr.mxu0 0.0
        %1210 = vmatpush1.msra.mxu0 %v1193
        %1211 = vmatprep.subr.mxu0 0.0
        %1212 = vmatpush1.msra.mxu0 %v1194
        %1213 = vmatprep.subr.mxu0 0.0
        %1214 = vmatpush1.msra.mxu0 %v1195
        %1215 = vmatprep.subr.mxu0 0.0
        %1216 = vmatpush1.msra.mxu0 %v1196
        %1217 = vmatprep.subr.mxu0 0.0
        %1218 = vmatpush1.msra.mxu0 %v1197
        %1219 = vmatprep.subr.mxu0 0.0
        %1220 = vmatpush1.msra.mxu0 %v1198
        %1221 = vmatprep.subr.mxu0 0.0
        %1222 = vmatpush1.msra.mxu0 %v1199
        %1223 = vmatprep.subr.mxu0 0.0
        %1224 = vmatpush1.msra.mxu0 %v1200
        %1225 = vmatprep.subr.mxu0 0.0
        %1226 = vmatpush1.msra.mxu0 %v1201
        %1227 = vmatprep.subr.mxu0 0.0
        %1228 = vmatpush1.msra.mxu0 %v1202
        %1229 = vmatprep.subr.mxu0 0.0
        %1230 = vmatpush1.msra.mxu0 %v1203
        %1231 = vmatprep.subr.mxu0 0.0
        %1232 = vmatpush1.msra.mxu0 %v1204
        %1233 = vmatprep.subr.mxu0 0.0
        %1234 = vmatpush1.msra.mxu0 %v1205
        %1235 = vmatprep.subr.mxu0 0.0
        %1236 = vmatpush1.msra.mxu0 %v1206
        %1237 = vmatprep.subr.mxu0 0.0
        %1238 = vmatpush1.msra.mxu0 %v1207
        %1239 = vmatprep.subr.mxu0 0.0
        %1240 = vmatpush1.msra.mxu0 %v1208
        %1241 = vmatprep.subr.mxu0 0.0
        %1242 = vmatpush1.msra.mxu0 0.0
        %1243 = vmatprep.subr.mxu0 0.0
        %1244 = vmatpush1.msra.mxu0 0.0
        %1245 = vmatprep.subr.mxu0 0.0
        %1246 = vmatpush1.msra.mxu0 0.0
        %1247 = vmatprep.subr.mxu0 0.0
        %1248 = vmatpush1.msra.mxu0 0.0
        %1249 = vmatprep.subr.mxu0 0.0
        %1250 = vmatpush1.msra.mxu0 0.0
        %1251 = vmatprep.subr.mxu0 0.0
        %1252 = vmatpush1.msra.mxu0 0.0
        %1253 = vmatprep.subr.mxu0 0.0
        %1254 = vmatpush1.msra.mxu0 0.0
        %1255 = vmatprep.subr.mxu0 0.0
        %1256 = vmatpush1.msra.mxu0 0.0
        %1257 = vmatprep.subr.mxu0 0.0
        %1258 = vmatpush1.msra.mxu0 0.0
        %1259 = vmatprep.subr.mxu0 0.0
        %1260 = vmatpush1.msra.mxu0 0.0
        %1261 = vmatprep.subr.mxu0 0.0
        %1262 = vmatpush1.msra.mxu0 0.0
        %1263 = vmatprep.subr.mxu0 0.0
        %1264 = vmatpush1.msra.mxu0 0.0
        %1265 = vmatprep.subr.mxu0 0.0
        %1266 = vmatpush1.msra.mxu0 0.0
        %1267 = vmatprep.subr.mxu0 0.0
        %1268 = vmatpush1.msra.mxu0 0.0
        %1269 = vmatprep.subr.mxu0 0.0
        %1270 = vmatpush1.msra.mxu0 0.0
        %1271 = vmatprep.subr.mxu0 0.0
        %1272 = vmatpush1.msra.mxu0 0.0
        %1273 = vmatprep.mubr.f32.mxu0 0.0
        %1274 = vmatmul.mubr.f32.gmra.mrb[0].mxu0 %v1191
        %v1275 = vpop.f32.mrb[0].mxu0
        %v1276 = vadd.f32 0.0, %v1275
        %v1277 = vpop.f32.mrb[0].mxu0
        %1278 = vmatprep.mubr.f32.mxu0 0.0
        %1279 = vmatmul.mubr.f32.gmra.mrb[0].mxu0 %v1192
        %v1280 = vpop.f32.mrb[0].mxu0
        %v1281 = vadd.f32 0.0, %v1280
        %v1282 = vpop.f32.mrb[0].mxu0
        %1283 = vdwg.mxu0
        %v1284 = vadd.f32 %v1189, %v1276
        %v1285 = vadd.f32 %v1190, %v1281
        %v1286 = vld [vmem:[#allocation2 + $0xa] sm:$0xff]
        %v1287 = vld [vmem:[#allocation2 + $0x12] sm:$0xff]
        %v1288 = vld [vmem:[#allocation7 + $0x380] sm:$0xff]
        %v1289 = vld [vmem:[#allocation7 + $0x388] sm:$0xff]
        %v1290 = vld [vmem:[#allocation7 + $0x390] sm:$0xff]
        %v1291 = vld [vmem:[#allocation7 + $0x398] sm:$0xff]
        %v1292 = vld [vmem:[#allocation7 + $0x3a0] sm:$0xff]
        %v1293 = vld [vmem:[#allocation7 + $0x3a8] sm:$0xff]
        %v1294 = vld [vmem:[#allocation7 + $0x3b0] sm:$0xff]
        %v1295 = vld [vmem:[#allocation7 + $0x3b8] sm:$0xff]
        %v1296 = vld [vmem:[#allocation7 + $0x3c0] sm:$0xff]
        %v1297 = vld [vmem:[#allocation7 + $0x3c8] sm:$0xff]
        %v1298 = vld [vmem:[#allocation7 + $0x3d0] sm:$0xff]
        %v1299 = vld [vmem:[#allocation7 + $0x3d8] sm:$0xff]
        %v1300 = vld [vmem:[#allocation7 + $0x3e0] sm:$0xff]
        %v1301 = vld [vmem:[#allocation7 + $0x3e8] sm:$0xff]
        %v1302 = vld [vmem:[#allocation7 + $0x3f0] sm:$0xff]
        %v1303 = vld [vmem:[#allocation7 + $0x3f8] sm:$0xff]
        %1304 = vmatprep.subr.mxu0 0.0
        %1305 = vmatpush1.msra.mxu0 %v1288
        %1306 = vmatprep.subr.mxu0 0.0
        %1307 = vmatpush1.msra.mxu0 %v1289
        %1308 = vmatprep.subr.mxu0 0.0
        %1309 = vmatpush1.msra.mxu0 %v1290
        %1310 = vmatprep.subr.mxu0 0.0
        %1311 = vmatpush1.msra.mxu0 %v1291
        %1312 = vmatprep.subr.mxu0 0.0
        %1313 = vmatpush1.msra.mxu0 %v1292
        %1314 = vmatprep.subr.mxu0 0.0
        %1315 = vmatpush1.msra.mxu0 %v1293
        %1316 = vmatprep.subr.mxu0 0.0
        %1317 = vmatpush1.msra.mxu0 %v1294
        %1318 = vmatprep.subr.mxu0 0.0
        %1319 = vmatpush1.msra.mxu0 %v1295
        %1320 = vmatprep.subr.mxu0 0.0
        %1321 = vmatpush1.msra.mxu0 %v1296
        %1322 = vmatprep.subr.mxu0 0.0
        %1323 = vmatpush1.msra.mxu0 %v1297
        %1324 = vmatprep.subr.mxu0 0.0
        %1325 = vmatpush1.msra.mxu0 %v1298
        %1326 = vmatprep.subr.mxu0 0.0
        %1327 = vmatpush1.msra.mxu0 %v1299
        %1328 = vmatprep.subr.mxu0 0.0
        %1329 = vmatpush1.msra.mxu0 %v1300
        %1330 = vmatprep.subr.mxu0 0.0
        %1331 = vmatpush1.msra.mxu0 %v1301
        %1332 = vmatprep.subr.mxu0 0.0
        %1333 = vmatpush1.msra.mxu0 %v1302
        %1334 = vmatprep.subr.mxu0 0.0
        %1335 = vmatpush1.msra.mxu0 %v1303
        %1336 = vmatprep.subr.mxu0 0.0
        %1337 = vmatpush1.msra.mxu0 0.0
        %1338 = vmatprep.subr.mxu0 0.0
        %1339 = vmatpush1.msra.mxu0 0.0
        %1340 = vmatprep.subr.mxu0 0.0
        %1341 = vmatpush1.msra.mxu0 0.0
        %1342 = vmatprep.subr.mxu0 0.0
        %1343 = vmatpush1.msra.mxu0 0.0
        %1344 = vmatprep.subr.mxu0 0.0
        %1345 = vmatpush1.msra.mxu0 0.0
        %1346 = vmatprep.subr.mxu0 0.0
        %1347 = vmatpush1.msra.mxu0 0.0
        %1348 = vmatprep.subr.mxu0 0.0
        %1349 = vmatpush1.msra.mxu0 0.0
        %1350 = vmatprep.subr.mxu0 0.0
        %1351 = vmatpush1.msra.mxu0 0.0
        %1352 = vmatprep.subr.mxu0 0.0
        %1353 = vmatpush1.msra.mxu0 0.0
        %1354 = vmatprep.subr.mxu0 0.0
        %1355 = vmatpush1.msra.mxu0 0.0
        %1356 = vmatprep.subr.mxu0 0.0
        %1357 = vmatpush1.msra.mxu0 0.0
        %1358 = vmatprep.subr.mxu0 0.0
        %1359 = vmatpush1.msra.mxu0 0.0
        %1360 = vmatprep.subr.mxu0 0.0
        %1361 = vmatpush1.msra.mxu0 0.0
        %1362 = vmatprep.subr.mxu0 0.0
        %1363 = vmatpush1.msra.mxu0 0.0
        %1364 = vmatprep.subr.mxu0 0.0
        %1365 = vmatpush1.msra.mxu0 0.0
        %1366 = vmatprep.subr.mxu0 0.0
        %1367 = vmatpush1.msra.mxu0 0.0
        %1368 = vmatprep.mubr.f32.mxu0 0.0
        %1369 = vmatmul.mubr.f32.gmra.mrb[0].mxu0 %v1286
        %v1370 = vpop.f32.mrb[0].mxu0
        %v1371 = vadd.f32 0.0, %v1370
        %v1372 = vpop.f32.mrb[0].mxu0
        %1373 = vmatprep.mubr.f32.mxu0 0.0
        %1374 = vmatmul.mubr.f32.gmra.mrb[0].mxu0 %v1287
        %v1375 = vpop.f32.mrb[0].mxu0
        %v1376 = vadd.f32 0.0, %v1375
        %v1377 = vpop.f32.mrb[0].mxu0
        %1378 = vdwg.mxu0
        %v1379 = vadd.f32 %v1284, %v1371
        %v1380 = vadd.f32 %v1285, %v1376
        %1381 = vst [vmem:[%s228] sm:$0xff] %v1379
        %1382 = vst [vmem:[%s228 + $0x8] sm:$0xff] %v1380
        %v1383 = vadd.f32 %v1379, %v1380
        %v1384 = vrot.slane %v1383, 4
        %v1385 = vadd.f32 %v1383, %v1384
        %v1386 = vrot.slane %v1385, 2
        %v1387 = vadd.f32 %v1385, %v1386
        %v1388 = vrot.slane %v1387, 1
        %v1389 = vadd.f32 %v1387, %v1388
        %v1390 = vadd.f32 %v1389, 0.0
        %v1391 = vmul.f32 %v1379, %v1379
        %v1392 = vmul.f32 %v1380, %v1380
        %v1393 = vadd.f32 %v1391, %v1392
        %v1394 = vrot.slane %v1393, 4
        %v1395 = vadd.f32 %v1393, %v1394
        %v1396 = vrot.slane %v1395, 2
        %v1397 = vadd.f32 %v1395, %v1396
        %v1398 = vrot.slane %v1397, 1
        %v1399 = vadd.f32 %v1397, %v1398
        %v1400 = vadd.f32 %v1399, 0.0
        %vm1401 = vcmask 1040384
        %v1402 = vsel %vm1401, %v1390, %v1400
        %vm1403 = vcmask 1041408
        %v1404 = vsel %vm1403, %v1402, %v610
        %vm1405 = vcmask 1042432
        %v1406 = vsel %vm1405, %v1404, %v620
        %vm1407 = vcmask 1043456
        %v1408 = vsel %vm1407, %v1406, 0.0
        %1409 = vst [vmem:[%s242] sm:$0xff] %v1408
        %s1410 = sand.u32 %s89, 1
        %s1411 = scalar_lea.sflag [#allocation6], %s1410
        %s1412 = sand.u32 %s89, 1
        %s1413 = smul.addr %s1412, 16
        %s1414 = scalar_lea.vmem [#allocation9], %s1413
        %s1415 = sand.u32 %s25, 1
        %s1416 = scalar_lea.sflag [#allocation11], %s1415
        %s1417 = sand.u32 %s117, 1
        %s1418 = smul.addr %s1417, 16
        %s1419 = scalar_lea.vmem [#allocation10], %s1418
        %s1420 = sand.u32 %s25, 1
        %s1421 = scalar_lea.sflag [#allocation11], %s1420
        %s1422 = sand.u32 %s145, 1
        %s1423 = smul.addr %s1422, 8
        %s1424 = scalar_lea.vmem [#allocation12], %s1423
        // Predicated region
        $region41: #{tpu_custom_call.1} parent=27 // pred_check
          %p1425 = pneg %p99
        $region42: #{tpu_custom_call.1} parent=27 // pred_check_branch
          %1427 = sbr.rel (%p1425) target = $region44
        $region43: #{tpu_custom_call.1} parent=27 // pred_region
          %s1428 = smul.u32 2, %s30
          %s1430 = ssub.s32 256, 256
          %1431 = vsyncadd %s1411, %s1430
          %s1432 = smul.addr %s29, 2
          %s1433 = sadd.s32 %s1428, %s1432
          %s1434 = smul.addr %s1433, 128
          %s1435 = scalar_lea.hbm %s3, %s1434
          %s1436 = sshll.u32 %s1414, 4
          %s1437 = int_to_ptr.vmem [resolvable:$true] %s1436
          %1442 = dma.vmem_to_hbm [thread:$0]  %s1437, 256, %s1435, %s1411, 128, 128, 8
        $region44: #{tpu_custom_call.1} parent=27 // pred_fallthru
          _
        // Predicated region
        $region45: #{tpu_custom_call.1} parent=27 // pred_check
          %p1443 = pneg %p127
        $region46: #{tpu_custom_call.1} parent=27 // pred_check_branch
          %1445 = sbr.rel (%p1443) target = $region48
        $region47: #{tpu_custom_call.1} parent=27 // pred_region
          %s1446 = smul.u32 2, %s30
          %s1448 = ssub.s32 256, 256
          %1449 = vsyncadd %s1416, %s1448
          %s1450 = smul.addr %s29, 2
          %s1451 = sadd.s32 %s1446, %s1450
          %s1452 = smul.addr %s1451, 128
          %s1453 = scalar_lea.hbm %s4, %s1452
          %s1454 = sshll.u32 %s1419, 4
          %s1455 = int_to_ptr.vmem [resolvable:$true] %s1454
          %1460 = dma.vmem_to_hbm [thread:$0]  %s1455, 256, %s1453, %s1416, 128, 128, 8
        $region48: #{tpu_custom_call.1} parent=27 // pred_fallthru
          _
        // Predicated region
        $region49: #{tpu_custom_call.1} parent=27 // pred_check
          %p1461 = pneg %p155
        $region50: #{tpu_custom_call.1} parent=27 // pred_check_branch
          %1463 = sbr.rel (%p1461) target = $region52
        $region51: #{tpu_custom_call.1} parent=27 // pred_region
          %s1465 = ssub.s32 128, 128
          %1466 = vsyncadd %s1421, %s1465
          %s1467 = sadd.s32 %s30, %s29
          %s1468 = smul.addr %s1467, 128
          %s1469 = scalar_lea.hbm %s5, %s1468
          %s1471 = sshll.u32 %s1424, 4
          %s1472 = int_to_ptr.vmem [resolvable:$true] %s1471
          %1474 = dma.vmem_to_hbm [thread:$0]  %s1472, 128, %s1469, %s1421
        $region52: #{tpu_custom_call.1} parent=27 // pred_fallthru
          _
      $region28: #{tpu_custom_call.1} parent=5 // pred_fallthru
        _
      %p1475 = scmp.le.s32.totalorder 2, %s20
      // Predicated region
      $region53: #{tpu_custom_call.1} parent=5 // pred_check
        %p1476 = pneg %p1475
      $region54: #{tpu_custom_call.1} parent=5 // pred_check_branch
        %1478 = sbr.rel (%p1476) target = $region56
      $region55: #{tpu_custom_call.1} parent=5 // pred_region
        %s1479 = ssub.s32 %s20, 2
        // Predicated region
        $region57: #{tpu_custom_call.1} parent=55 // pred_check
          %p1480 = pneg %p105
        $region58: #{tpu_custom_call.1} parent=55 // pred_check_branch
          %1482 = sbr.rel (%p1480) target = $region60
        $region59: #{tpu_custom_call.1} parent=55 // pred_region
          %s1483 = sand.u32 %s90, 1
          %s1484 = scalar_lea.sflag [#allocation6], %s1483
          %s1485 = sand.u32 %s90, 1
          %s1486 = smul.addr %s1485, 16
          %s1487 = scalar_lea.vmem [#allocation9], %s1486
          %1488 = dma.done %s1484, 256
        $region60: #{tpu_custom_call.1} parent=55 // pred_fallthru
          _
        // Predicated region
        $region61: #{tpu_custom_call.1} parent=55 // pred_check
          %p1489 = pneg %p133
        $region62: #{tpu_custom_call.1} parent=55 // pred_check_branch
          %1491 = sbr.rel (%p1489) target = $region64
        $region63: #{tpu_custom_call.1} parent=55 // pred_region
          %s1492 = sand.u32 %s26, 1
          %s1493 = scalar_lea.sflag [#allocation11], %s1492
          %s1494 = sand.u32 %s118, 1
          %s1495 = smul.addr %s1494, 16
          %s1496 = scalar_lea.vmem [#allocation10], %s1495
          %1497 = dma.done %s1493, 256
        $region64: #{tpu_custom_call.1} parent=55 // pred_fallthru
          _
        // Predicated region
        $region65: #{tpu_custom_call.1} parent=55 // pred_check
          %p1498 = pneg %p161
        $region66: #{tpu_custom_call.1} parent=55 // pred_check_branch
          %1500 = sbr.rel (%p1498) target = $region68
        $region67: #{tpu_custom_call.1} parent=55 // pred_region
          %s1501 = sand.u32 %s26, 1
          %s1502 = scalar_lea.sflag [#allocation11], %s1501
          %s1503 = sand.u32 %s146, 1
          %s1504 = smul.addr %s1503, 8
          %s1505 = scalar_lea.vmem [#allocation12], %s1504
          %1506 = dma.done %s1502, 128
        $region68: #{tpu_custom_call.1} parent=55 // pred_fallthru
          _
      $region56: #{tpu_custom_call.1} parent=5 // pred_fallthru
        _
    $region6: #{tpu_custom_call.1} parent=1 // loop_footer
      %s24 = sadd.s32 1, %s20
    $region7: #{tpu_custom_call.1} parent=1 // loop_footer_branch
      %19 = sbr.rel target = $region3
    $region8: #{tpu_custom_call.1} parent=1 // loop_exit
      _
    %1507 = vsyncpa [#allocation5], 1
    %s1508 = scalar_lea.sflag [#allocation5], 1
    %1509 = vsyncpa %s1508, 1
    %1510 = vsyncpa [#allocation8], 1
    %1511 = vsyncpa [#allocation6], 1
    %s1512 = scalar_lea.sflag [#allocation6], 1
    %1513 = vsyncpa %s1512, 1
    %1514 = vsyncpa [#allocation11], 1
    %s1515 = scalar_lea.sflag [#allocation11], 1
    %1516 = vsyncpa %s1515, 1
  %1517 = vsyncmov [#allocation3]
  %s1518 = vpop.sfrf %1517
  %p1519 = scmp.eq.s32.totalorder %s1518, 0
  %p1520 = pneg %p1519
  %1522 = shalt.err (%p1520)

</llo_original>
